<compile_context>
chip_gen: v5e
topology: v5e:2x2
jax: 0.10.0
libtpu: 0.0.40
codegen_flags: <defaults>
</compile_context>

<pallas_src>
import math

import jax
import jax.numpy as jnp
from jax.experimental import pallas as pl
from jax.experimental.pallas import tpu as pltpu


def _pe_kernel(row_ref, col_ref, out_ref):
    """out = sin(row + col); row/col are pre-shaped so broadcasting yields the
    full output tile.
      HWC path: row (th, 1, C2p) + col (1, W, C2p) -> out (th, W, C2p)
      CHW path: row (C2p, th, 1) + col (C2p, 1, W) -> out (C2p, th, W)
    """
    out_ref[...] = jnp.sin(row_ref[...] + col_ref[...]).astype(out_ref.dtype)


def _pick_row_tile(h: int, w: int, c2: int, itemsize: int,
                   target_bytes: int = 4 << 20,
                   min_grid_steps: int = 2) -> int:
    """Row-tile height: largest divisor of h giving <= ~4 MiB output tiles,
    satisfying the (8,128) block rule (th % 8 == 0 or th == h), and preferring
    >= 2 grid steps so v7x megacore can shard the 'parallel' axis."""
    row_bytes = w * c2 * itemsize
    cap = max(1, min(h, target_bytes // max(row_bytes, 1)))
    valid = [d for d in range(1, h + 1)
             if h % d == 0 and (d % 8 == 0 or d == h)]
    under = [d for d in valid if d <= cap]
    th = max(under) if under else min(valid)
    if th == h and min_grid_steps > 1 and (h // min_grid_steps) in valid:
        th = h // min_grid_steps
    return th


def position_embedding_random(gaussian_matrix: jax.Array, size: int, *,
                              row_tile: int | None = None,
                              channels_last: bool = False,
                              out_dtype=jnp.float32) -> jax.Array:
    """SAM PositionEmbeddingRandom.forward(size).

    Returns (2*num_pos_feats, size, size) by default (matching the PyTorch
    module); (size, size, 2*num_pos_feats) if channels_last=True.
    out_dtype=jnp.bfloat16 halves HBM writeback if consumers tolerate it.
    """
    h = w = int(size)
    two, c = gaussian_matrix.shape
    assert two == 2
    c2 = 2 * c
    c2p = ((c2 + 127) // 128) * 128      # lane-dense channel dim (pad -> slice)

    # ---- Wrapper-side coefficient precompute (tiny, done once per call) ----
    g = gaussian_matrix.astype(jnp.float32)
    two_pi = 2.0 * math.pi
    # Normalized coordinates first (exactly like the reference) -> no
    # large-size cancellation from folding the affine into per-channel coeffs.
    xs = (jnp.arange(w, dtype=jnp.float32) + 0.5) * (2.0 / w) - 1.0   # (w,)
    ys = (jnp.arange(h, dtype=jnp.float32) + 0.5) * (2.0 / h) - 1.0   # (h,)
    gx = two_pi * g[0]                                                 # (c,)
    gy = two_pi * g[1]                                                 # (c,)
    gx2 = jnp.concatenate([gx, gx])                                    # (2c,)
    gy2 = jnp.concatenate([gy, gy])                                    # (2c,)
    phase2 = jnp.concatenate([jnp.zeros((c,), jnp.float32),
                              jnp.full((c,), 0.5 * math.pi, jnp.float32)])
    if c2p != c2:                       # pad channels to a 128-lane multiple
        pad = c2p - c2
        gx2 = jnp.pad(gx2, (0, pad))
        gy2 = jnp.pad(gy2, (0, pad))
        phase2 = jnp.pad(phase2, (0, pad))
    col_term = xs[:, None] * gx2[None, :] + phase2[None, :]   # (w, c2p)
    row_term = ys[:, None] * gy2[None, :]                     # (h, c2p)

    itemsize = jnp.dtype(out_dtype).itemsize
    th = (_pick_row_tile(h, w, c2p, itemsize) if row_tile is None
          else int(row_tile))
    assert h % th == 0 and (th % 8 == 0 or th == h), (h, th)
    grid = (h // th,)
    # 4 MiB-capped tiles keep double-buffered VMEM well under every
    # generation's default scoped limit, so no vmem_limit_bytes override.
    params = pltpu.CompilerParams(dimension_semantics=("parallel",))

    chw_direct = (not channels_last) and (w % 128 == 0)

    if not chw_direct:
        # ---- HWC in-kernel (lane dim = channels = c2p, unmasked stores) ----
        pe = pl.pallas_call(
            _pe_kernel,
            out_shape=jax.ShapeDtypeStruct((h, w, c2p), out_dtype),
            grid=grid,
            in_specs=[pl.BlockSpec((th, 1, c2p), lambda r: (r, 0, 0)),
                      pl.BlockSpec((1, w, c2p), lambda r: (0, 0, 0))],
            out_specs=pl.BlockSpec((th, w, c2p), lambda r: (r, 0, 0)),
            compiler_params=params,
        )(row_term[:, None, :], col_term[None, :, :])
        if c2p != c2:
            pe = pe[..., :c2]
        if channels_last:
            return pe
        # Small grids (SAM's 64x64): a single cheap wrapper transpose beats
        # masked 64-lane in-kernel stores.
        return pe.transpose(2, 0, 1)

    # ---- CHW emitted directly from the kernel (lane dim = W >= 128) ----
    pe = pl.pallas_call(
        _pe_kernel,
        out_shape=jax.ShapeDtypeStruct((c2p, h, w), out_dtype),
        grid=grid,
        in_specs=[pl.BlockSpec((c2p, th, 1), lambda r: (0, r, 0)),
                  pl.BlockSpec((c2p, 1, w), lambda r: (0, 0, 0))],
        out_specs=pl.BlockSpec((c2p, th, w), lambda r: (0, r, 0)),
        compiler_params=params,
    )(row_term.T[:, :, None], col_term.T[:, None, :])
    return pe[:c2] if c2p != c2 else pe


def _reference(gaussian_matrix: jax.Array, size: int) -> jax.Array:
    """Pure-JAX reference mirroring the PyTorch module exactly."""
    h = w = size
    grid = jnp.ones((h, w), dtype=jnp.float32)
    y_embed = (jnp.cumsum(grid, axis=0) - 0.5) / h
    x_embed = (jnp.cumsum(grid, axis=1) - 0.5) / w
    coords = jnp.stack([x_embed, y_embed], axis=-1)          # (h, w, 2)
    coords = 2.0 * coords - 1.0
    coords = coords @ gaussian_matrix                        # (h, w, C)
    coords = 2.0 * math.pi * coords
    pe = jnp.concatenate([jnp.sin(coords), jnp.cos(coords)], axis=-1)
    return pe.transpose(2, 0, 1)                             # (2C, h, w)


if __name__ == "__main__":
    key = jax.random.PRNGKey(0)
    k1, k2 = jax.random.split(key)

    # Deterministic stand-ins for `scale * torch.randn((2, num_pos_feats))`.
    g64 = jax.random.normal(k1, (2, 64), dtype=jnp.float32)   # 2C = 128 lanes
    g48 = jax.random.normal(k2, (2, 48), dtype=jnp.float32)   # 2C = 96 -> pad

    def check(g, size, **kw):
        out = jax.block_until_ready(position_embedding_random(g, size, **kw))
        ref = _reference(g, size)
        if kw.get("channels_last"):
            ref = ref.transpose(1, 2, 0)
        assert out.shape == ref.shape, (size, kw, out.shape, ref.shape)
        err = float(jnp.max(jnp.abs(out - ref)))
        assert err < 1e-4, (size, kw, err)

    check(g64, 16)                       # small grid, 2 steps (megacore-friendly)
    check(g64, 16, row_tile=16)          # forced single-tile variant
    check(g64, 64)                       # SAM's typical grid: HWC + wrapper transpose
    check(g64, 64, channels_last=True)   # no transpose at all
    check(g64, 128)                      # CHW emitted directly from the kernel
    check(g48, 64)                       # padded channels (96 -> 128), sliced off

    print("KERNEL_OK")
</pallas_src>

<mosaic_0001>
module attributes {stable_mosaic.version = 11 : i64} {
  func.func @_pe_kernel(%arg0: i32, %arg1: memref<8x1x128xf32, #tpu.memory_space<vmem>>, %arg2: memref<1x16x128xf32, #tpu.memory_space<vmem>>, %arg3: memref<8x16x128xf32, #tpu.memory_space<vmem>>) attributes {dimension_semantics = [#tpu.dimension_semantics<parallel>], iteration_bounds = array<i64: 2>, scalar_prefetch = 0 : i64, scratch_operands = 0 : i64, tpu.core_type = #tpu.core_type<tc>, window_params = [{transform_indices = @transform_0, window_bounds = array<i64: 8, 1, 128>}, {pipeline_mode = #tpu.pipeline_mode<synchronous>, transform_indices = @transform_1, window_bounds = array<i64: 1, 16, 128>}, {transform_indices = @transform_2, window_bounds = array<i64: 8, 16, 128>}]} {
    %c0 = arith.constant 0 : index
    %c0_0 = arith.constant 0 : index
    %c0_1 = arith.constant 0 : index
    %0 = vector.load %arg1[%c0, %c0_0, %c0_1] : memref<8x1x128xf32, #tpu.memory_space<vmem>>, vector<8x1x128xf32>
    %c0_2 = arith.constant 0 : index
    %c0_3 = arith.constant 0 : index
    %c0_4 = arith.constant 0 : index
    %1 = vector.load %arg2[%c0_2, %c0_3, %c0_4] : memref<1x16x128xf32, #tpu.memory_space<vmem>>, vector<1x16x128xf32>
    %2 = vector.broadcast %0 : vector<8x1x128xf32> to vector<8x16x128xf32>
    %3 = vector.broadcast %1 : vector<1x16x128xf32> to vector<8x16x128xf32>
    %4 = arith.addf %2, %3 : vector<8x16x128xf32>
    %5 = math.sin %4 : vector<8x16x128xf32>
    %c0_5 = arith.constant 0 : index
    %c0_6 = arith.constant 0 : index
    %c0_7 = arith.constant 0 : index
    %6 = vector.load %arg3[%c0_5, %c0_6, %c0_7] : memref<8x16x128xf32, #tpu.memory_space<vmem>>, vector<8x16x128xf32>
    tpu.vector_store %arg3[%c0_5, %c0_6, %c0_7], %5 {strides = array<i32>} : memref<8x16x128xf32, #tpu.memory_space<vmem>>, vector<8x16x128xf32>,
    return
  }
  func.func @transform_0(%arg0: i32) -> (i32, i32, i32) {
    %c0_i32 = arith.constant 0 : i32
    %c0_i32_0 = arith.constant 0 : i32
    %c0_i32_1 = arith.constant 0 : i32
    return %arg0, %c0_i32, %c0_i32_0 : i32, i32, i32
  }
  func.func @transform_1(%arg0: i32) -> (i32, i32, i32) {
    %c0_i32 = arith.constant 0 : i32
    %c0_i32_0 = arith.constant 0 : i32
    %c0_i32_1 = arith.constant 0 : i32
    %c0_i32_2 = arith.constant 0 : i32
    return %c0_i32, %c0_i32_0, %c0_i32_1 : i32, i32, i32
  }
  func.func @transform_2(%arg0: i32) -> (i32, i32, i32) {
    %c0_i32 = arith.constant 0 : i32
    %c0_i32_0 = arith.constant 0 : i32
    %c0_i32_1 = arith.constant 0 : i32
    return %arg0, %c0_i32, %c0_i32_0 : i32, i32, i32
  }
}

</mosaic_0001>

<llo_original>
// kernel: tpu_custom_call.1
$region0: #{tpu_custom_call.1}
  #allocation0 [shape = 'u32[]', space=smem, size = 0x4, offset = 0x4, fixed_abs, tag = 'smem constant byte address 0x4 - core index']
  #allocation1 [shape = 'u32[72,128]{1,0:T(1,128)}', space=vmem, size = 0x9000, scoped, tag = 'internal scratch']
  %s0 = inlined_call_operand.hbm [shape: f32[16,1,128], index: 0, kind: input, shape index: {}]
  %s1 = inlined_call_operand.hbm [shape: f32[1,16,128], index: 1, kind: input, shape index: {}]
  %s2 = inlined_call_operand.hbm [shape: f32[16,16,128], index: 2, kind: output, shape index: {}]
  %s3 = sld [smem:[#allocation0]]
  $region49: #{tpu_custom_call.1} parent=0
    _
  %s5 = ssub.s32 1, %s3
  %s6 = scalar_select 0, %s5, %s3
  $region1: #{tpu_custom_call.1} parent=0
    #allocation2 [shape = 'u8[8192]{0}', space=vmem, size = 0x2000, scoped, tag = 'input window, operand 0']
    #allocation3 [shape = 's32[2]{0}', space=sflag, size = 0x8, scoped, tag = 'scoped memory for tpu_custom_call.1']
    #allocation4 [shape = 's32[2]{0}', space=sflag, size = 0x8, scoped, tag = 'scoped memory for tpu_custom_call.1']
    #allocation5 [shape = 'u8[8192]{0}', space=vmem, size = 0x2000, scoped, tag = 'input window, operand 1, single buffered']
    #allocation6 [shape = 's32[1]{0}', space=sflag, size = 0x4, scoped, tag = 'scoped memory for tpu_custom_call.1']
    #allocation7 [shape = 'u8[131072]{0}', space=vmem, size = 0x20000, scoped, tag = 'output window, operand 0']
    %7 = vsyncpa [#allocation3], 0
    %s8 = scalar_lea.sflag [#allocation3], 1
    %9 = vsyncpa %s8, 0
    %10 = vsyncpa [#allocation6], 0
    %11 = vsyncpa [#allocation4], 0
    %s12 = scalar_lea.sflag [#allocation4], 1
    %13 = vsyncpa %s12, 0
    loop: start=0, step=1, limit=4
    $region2: #{tpu_custom_call.1} parent=1 // loop_pre_header
      _
    $region3: #{tpu_custom_call.1} parent=1 // loop_header
      %s15 = sphi 0, %s19
      %p16 = scmp.ge.s32.totalorder %s15, 4
      %s25 = sphi 0, %s27
      %s28 = sphi 0, %s25
      %s29 = sphi 0, %s28
      %s45 = sphi 0, %s29
      %s49 = sphi 0, %s49
      %s51 = sphi 0, %s49
      %s52 = sphi 0, %s51
      %s66 = sphi 0, %s52
      %s72 = sphi 0, %s74
      %s75 = sphi 0, %s72
      %s76 = sphi 0, %s75
      %s92 = sphi 0, %s76
    $region4: #{tpu_custom_call.1} parent=1 // loop_header_branch
      %18 = sbr.rel (%p16) target = $region8
    $region5: #{tpu_custom_call.1} parent=1 // loop_body
      %s20 = ssub.s32 %s15, 1
      %s21 = ssub.s32 %s15, 2
      %s22 = sadd.s32 %s15, 1
      %s23 = ssub.s32 %s15, %s22
      %p24 = scmp.eq.s32.totalorder %s23, 0
      %s26 = sadd.s32 %s25, 1
      %s27 = scalar_select %p24, %s25, %s26
      %p30 = pneg %p24
      %p31 = scmp.eq.s32.totalorder %s15, 1
      %p32 = por %p30, %p31
      %p33 = scmp.ne.s32.totalorder %s25, %s28
      %p34 = scmp.eq.s32.totalorder %s15, 0
      %p35 = por %p33, %p34
      %p36 = scmp.ne.s32.totalorder %s25, %s28
      %p37 = scmp.eq.s32.totalorder %s20, 1
      %p38 = por %p36, %p37
      %p39 = scmp.ne.s32.totalorder %s28, %s29
      %p40 = scmp.eq.s32.totalorder %s20, 0
      %p41 = por %p39, %p40
      %p42 = scmp.ne.s32.totalorder %s28, %s29
      %p43 = scmp.eq.s32.totalorder %s21, 1
      %p44 = por %p42, %p43
      %p46 = scmp.ne.s32.totalorder %s29, %s45
      %p47 = scmp.eq.s32.totalorder %s21, 0
      %p48 = por %p46, %p47
      %s50 = sadd.s32 %s49, 1
      %p53 = scmp.eq.s32.totalorder %s15, 1
      %p54 = scmp.ne.s32.totalorder %s49, %s51
      %p55 = scmp.eq.s32.totalorder %s15, 0
      %p56 = por %p54, %p55
      %p57 = scmp.ne.s32.totalorder %s49, %s51
      %p58 = scmp.eq.s32.totalorder %s20, 1
      %p59 = por %p57, %p58
      %p60 = scmp.ne.s32.totalorder %s51, %s52
      %p61 = scmp.eq.s32.totalorder %s20, 0
      %p62 = por %p60, %p61
      %p63 = scmp.ne.s32.totalorder %s51, %s52
      %p64 = scmp.eq.s32.totalorder %s21, 1
      %p65 = por %p63, %p64
      %p67 = scmp.ne.s32.totalorder %s52, %s66
      %p68 = scmp.eq.s32.totalorder %s21, 0
      %p69 = por %p67, %p68
      %s70 = ssub.s32 %s15, %s22
      %p71 = scmp.eq.s32.totalorder %s70, 0
      %s73 = sadd.s32 %s72, 1
      %s74 = scalar_select %p71, %s72, %s73
      %p77 = pneg %p71
      %p78 = scmp.eq.s32.totalorder %s15, 1
      %p79 = por %p77, %p78
      %p80 = scmp.ne.s32.totalorder %s72, %s75
      %p81 = scmp.eq.s32.totalorder %s15, 0
      %p82 = por %p80, %p81
      %p83 = scmp.ne.s32.totalorder %s72, %s75
      %p84 = scmp.eq.s32.totalorder %s20, 1
      %p85 = por %p83, %p84
      %p86 = scmp.ne.s32.totalorder %s75, %s76
      %p87 = scmp.eq.s32.totalorder %s20, 0
      %p88 = por %p86, %p87
      %p89 = scmp.ne.s32.totalorder %s75, %s76
      %p90 = scmp.eq.s32.totalorder %s21, 1
      %p91 = por %p89, %p90
      %p93 = scmp.ne.s32.totalorder %s76, %s92
      %p94 = scmp.eq.s32.totalorder %s21, 0
      %p95 = por %p93, %p94
      %p96 = scmp.le.s32.totalorder 1, %s15
      %p97 = scmp.lt.s32.totalorder %s15, 3
      %p98 = pnand %p96, %p97
      %p99 = pneg %p98
      // Predicated region
      $region9: #{tpu_custom_call.1} parent=5 // pred_check
        _
      $region10: #{tpu_custom_call.1} parent=5 // pred_check_branch
        %101 = sbr.rel (%p98) target = $region12
      $region11: #{tpu_custom_call.1} parent=5 // pred_region
        %s102 = ssub.s32 %s15, 1
        // Predicated region
        $region13: #{tpu_custom_call.1} parent=11 // pred_check
          %p103 = pneg %p62
        $region14: #{tpu_custom_call.1} parent=11 // pred_check_branch
          %105 = sbr.rel (%p103) target = $region16
        $region15: #{tpu_custom_call.1} parent=11 // pred_region
          %107 = vsyncadd [#allocation6], 0
          %s108 = sshll.u32 %s1, 4
          %s109 = int_to_ptr.hbm [resolvable:$true] %s108
          %s110 = sshll.u32 [#allocation5], 4
          %s111 = int_to_ptr.vmem [resolvable:$true] %s110
          %116 = dma.hbm_to_vmem [thread:$0]  %s109, 256, %s111, [#allocation6], 128, 128, 8
        $region16: #{tpu_custom_call.1} parent=11 // pred_fallthru
          _
      $region12: #{tpu_custom_call.1} parent=5 // pred_fallthru
        _
      %p117 = scmp.lt.s32.totalorder %s15, 2
      // Predicated region
      $region17: #{tpu_custom_call.1} parent=5 // pred_check
        %p118 = pneg %p117
      $region18: #{tpu_custom_call.1} parent=5 // pred_check_branch
        %120 = sbr.rel (%p118) target = $region20
      $region19: #{tpu_custom_call.1} parent=5 // pred_region
        // Predicated region
        $region21: #{tpu_custom_call.1} parent=19 // pred_check
          %p121 = pneg %p35
        $region22: #{tpu_custom_call.1} parent=19 // pred_check_branch
          %123 = sbr.rel (%p121) target = $region24
        $region23: #{tpu_custom_call.1} parent=19 // pred_region
          %s124 = sand.u32 %s25, 1
          %s125 = scalar_lea.sflag [#allocation3], %s124
          %s126 = sand.u32 %s25, 1
          %s127 = smul.addr %s126, 8
          %s128 = scalar_lea.vmem [#allocation2], %s127
          %s129 = smul.u32 8, %s15
          %131 = vsyncadd %s125, 0
          %s132 = scalar_lea.hbm %s0, %s129
          %s133 = sshll.u32 %s132, 4
          %s134 = int_to_ptr.hbm [resolvable:$true] %s133
          %s135 = sshll.u32 %s128, 4
          %s136 = int_to_ptr.vmem [resolvable:$true] %s135
          %141 = dma.hbm_to_vmem [thread:$0]  %s134, 128, %s136, %s125, 16, 16, 1
        $region24: #{tpu_custom_call.1} parent=19 // pred_fallthru
          _
      $region20: #{tpu_custom_call.1} parent=5 // pred_fallthru
        _
      %p142 = scmp.le.s32.totalorder 1, %s15
      %p143 = scmp.lt.s32.totalorder %s15, 3
      %p144 = pnand %p142, %p143
      %p145 = pneg %p144
      // Predicated region
      $region25: #{tpu_custom_call.1} parent=5 // pred_check
        _
      $region26: #{tpu_custom_call.1} parent=5 // pred_check_branch
        %147 = sbr.rel (%p144) target = $region28
      $region27: #{tpu_custom_call.1} parent=5 // pred_region
        %s148 = ssub.s32 %s15, 1
        %s149 = sand.u32 %s28, 1
        %s150 = scalar_lea.sflag [#allocation3], %s149
        %s151 = sand.u32 %s28, 1
        %s152 = smul.addr %s151, 8
        %s153 = scalar_lea.vmem [#allocation2], %s152
        // Predicated region
        $region29: #{tpu_custom_call.1} parent=27 // pred_check
          %p154 = pneg %p41
        $region30: #{tpu_custom_call.1} parent=27 // pred_check_branch
          %156 = sbr.rel (%p154) target = $region32
        $region31: #{tpu_custom_call.1} parent=27 // pred_region
          %158 = dma.done %s150, 128
        $region32: #{tpu_custom_call.1} parent=27 // pred_fallthru
          _
        // Predicated region
        $region33: #{tpu_custom_call.1} parent=27 // pred_check
          %p159 = pneg %p62
        $region34: #{tpu_custom_call.1} parent=27 // pred_check_branch
          %161 = sbr.rel (%p159) target = $region36
        $region35: #{tpu_custom_call.1} parent=27 // pred_region
          %163 = dma.done [#allocation6], 256
        $region36: #{tpu_custom_call.1} parent=27 // pred_fallthru
          _
        %s164 = sand.u32 %s28, 1
        %s165 = scalar_lea.sflag [#allocation3], %s164
        %s166 = sand.u32 %s28, 1
        %s167 = smul.addr %s166, 8
        %s168 = scalar_lea.vmem [#allocation2], %s167
        %p169 = pneg %p41
        %p170 = pneg %p38
        %p171 = pneg %p62
        %p172 = pneg %p59
        %p173 = pneg %p88
        %p174 = pneg %p85
        %s175 = sand.u32 %s75, 1
        %s176 = scalar_lea.sflag [#allocation4], %s175
        %s177 = sand.u32 %s75, 1
        %s178 = smul.addr %s177, 128
        %s179 = scalar_lea.vmem [#allocation7], %s178
        %s180 = smul.u32 8, %s20
        %s181 = smul.u32 8, %s20
        %v182 = vld [vmem:[%s153] sm:$0x1]
        %v183 = vld [vmem:[%s153 + $0x1] sm:$0x1]
        %v184 = vld [vmem:[%s153 + $0x2] sm:$0x1]
        %v185 = vld [vmem:[%s153 + $0x3] sm:$0x1]
        %v186 = vld [vmem:[%s153 + $0x4] sm:$0x1]
        %v187 = vld [vmem:[%s153 + $0x5] sm:$0x1]
        %v188 = vld [vmem:[%s153 + $0x6] sm:$0x1]
        %v189 = vld [vmem:[%s153 + $0x7] sm:$0x1]
        %v190 = vld [vmem:[#allocation5] sm:$0xff]
        %v191 = vld [vmem:[#allocation5 + $0x8] sm:$0xff]
        %v200 = vperm.slane %v182, 0
        %v201 = vperm.slane %v183, 0
        %v202 = vperm.slane %v184, 0
        %v203 = vperm.slane %v185, 0
        %v204 = vperm.slane %v186, 0
        %v205 = vperm.slane %v187, 0
        %v206 = vperm.slane %v188, 0
        %v207 = vperm.slane %v189, 0
        %v216 = vadd.f32 %v200, %v190
        %v217 = vadd.f32 %v200, %v191
        %v218 = vadd.f32 %v201, %v190
        %v219 = vadd.f32 %v201, %v191
        %v220 = vadd.f32 %v202, %v190
        %v221 = vadd.f32 %v202, %v191
        %v222 = vadd.f32 %v203, %v190
        %v223 = vadd.f32 %v203, %v191
        %v224 = vadd.f32 %v204, %v190
        %v225 = vadd.f32 %v204, %v191
        %v226 = vadd.f32 %v205, %v190
        %v227 = vadd.f32 %v205, %v191
        %v228 = vadd.f32 %v206, %v190
        %v229 = vadd.f32 %v206, %v191
        %v230 = vadd.f32 %v207, %v190
        %v231 = vadd.f32 %v207, %v191
        %v232 = vand.u32 2147483647, %v216
        %vm233 = vcmp.le.f32.partialorder %v232, 0.7853982
        %vm234 = vcmp.lt.s32.totalorder %v216, 0
        %v235 = vand.u32 %v216, 2139095040
        %v236 = vshrl.u32 %v235, 23
        %v237 = vsub.s32 %v236, 127
        %v238 = vand.u32 2147483647, %v216
        %v239 = vand.u32 %v238, 8388607
        %v240 = vor.u32 %v239, 8388608
        %v241 = vsub.s32 0, %v240
        %v242 = vadd.s32 %v237, 1
        %vm243 = vcmp.gt.s32.totalorder %v242, 0
        %v244 = vsel %vm243, %v242, 0
        %v245 = vshrl.u32 %v244, 5
        %v246 = vand.u32 %v244, 31
        %v247 = vsub.s32 32, %v246
        %v248 = vshrl.u32 683565275, %v247
        %v249 = vshll.u32 683565275, %v246
        %v250 = vshrl.u32 2475754826, %v247
        %v251 = vor.u32 %v249, %v250
        %v252 = vshll.u32 2475754826, %v246
        %v253 = vshrl.u32 2131351028, %v247
        %v254 = vor.u32 %v252, %v253
        %v255 = vshll.u32 2131351028, %v246
        %v256 = vshrl.u32 2102212464, %v247
        %v257 = vor.u32 %v255, %v256
        %v258 = vshll.u32 2102212464, %v246
        %v259 = vshrl.u32 920167782, %v247
        %v260 = vor.u32 %v258, %v259
        %v261 = vshll.u32 920167782, %v246
        %v262 = vshrl.u32 1326507024, %v247
        %v263 = vor.u32 %v261, %v262
        %vm264 = vcmp.lt.s32.totalorder %v245, 1
        %vm265 = vcmp.lt.s32.totalorder %v245, 2
        %vm266 = vcmp.lt.s32.totalorder %v245, 3
        %vm267 = vcmp.lt.s32.totalorder %v245, 4
        %v268 = vsel %vm264, %v248, %v251
        %v269 = vsel %vm267, %v257, 2102212464
        %v270 = vsel %vm266, %v254, %v269
        %v271 = vsel %vm265, %v268, %v270
        %v272 = vsel %vm264, %v251, %v254
        %v273 = vsel %vm267, %v260, 920167782
        %v274 = vsel %vm266, %v257, %v273
        %v275 = vsel %vm265, %v272, %v274
        %v276 = vsel %vm264, %v254, %v257
        %v277 = vsel %vm267, %v263, 1326507024
        %v278 = vsel %vm266, %v260, %v277
        %v279 = vsel %vm265, %v276, %v278
        %v280 = vshll.u32 %v240, 8
        %v281 = vand.u32 %v280, 65535
        %v282 = vshrl.u32 %v280, 16
        %v283 = vand.u32 %v279, 65535
        %v284 = vshrl.u32 %v279, 16
        %v285 = vmul.u32 %v281, %v283
        %v286 = vmul.u32 %v281, %v284
        %v287 = vmul.u32 %v282, %v283
        %v288 = vmul.u32 %v282, %v284
        %v289 = vshll.u32 %v286, 16
        %v290 = vshrl.u32 %v286, 16
        %v291 = vshll.u32 %v287, 16
        %v292 = vshrl.u32 %v287, 16
        %vm293 = vc.u32 %v285, %v289
        %v294 = vsel %vm293, 1, 0
        %v295 = vadd.s32 %v285, %v289
        %v296 = vadd.s32 %v288, %v294
        %vm297 = vc.u32 %v295, %v291
        %v298 = vsel %vm297, 1, 0
        %v299 = vadd.s32 %v295, %v291
        %v300 = vadd.s32 %v296, %v298
        %v301 = vadd.s32 %v300, %v290
        %v302 = vadd.s32 %v301, %v292
        %v303 = vand.u32 %v280, 65535
        %v304 = vshrl.u32 %v280, 16
        %v305 = vand.u32 %v275, 65535
        %v306 = vshrl.u32 %v275, 16
        %v307 = vmul.u32 %v303, %v305
        %v308 = vmul.u32 %v303, %v306
        %v309 = vmul.u32 %v304, %v305
        %v310 = vmul.u32 %v304, %v306
        %v311 = vshll.u32 %v308, 16
        %v312 = vshrl.u32 %v308, 16
        %v313 = vshll.u32 %v309, 16
        %v314 = vshrl.u32 %v309, 16
        %vm315 = vc.u32 %v307, %v311
        %v316 = vsel %vm315, 1, 0
        %v317 = vadd.s32 %v307, %v311
        %v318 = vadd.s32 %v310, %v316
        %vm319 = vc.u32 %v317, %v313
        %v320 = vsel %vm319, 1, 0
        %v321 = vadd.s32 %v317, %v313
        %v322 = vadd.s32 %v318, %v320
        %v323 = vadd.s32 %v322, %v312
        %v324 = vadd.s32 %v323, %v314
        %v325 = vmul.u32 %v280, %v271
        %v326 = vadd.s32 %v302, %v321
        %vm327 = vc.u32 %v302, %v321
        %v328 = vadd.s32 %v324, 1
        %v329 = vsel %vm327, %v328, %v324
        %v330 = vadd.s32 %v325, %v329
        %v331 = vadd.s32 %v330, 536870912
        %v332 = vshrl.u32 %v331, 30
        %v333 = vshll.u32 %v332, 30
        %v334 = vsub.s32 %v330, %v333
        %vm335 = vcmp.lt.s32.totalorder %v334, 0
        %v336 = vsub.s32 0, %v334
        %v337 = vsel %vm335, %v336, %v334
        %v338 = vclz %v337
        %v339 = vsub.s32 %v338, 2
        %vm340 = vcmp.gt.s32.totalorder 0, %v339
        %v341 = vsel %vm340, 0, %v339
        %v342 = vsub.s32 32, %v341
        %v343 = vshll.u32 %v334, %v341
        %v344 = vshrl.u32 %v326, %v342
        %v345 = vor.u32 %v343, %v344
        %v346 = vsub.s32 4294967266, %v341
        %v347 = vadd.s32 %v346, 127
        %v348 = vshll.u32 %v347, 23
        %v349 = vor.u32 4788187, %v348
        %v350 = vand.u32 2147483647, %v349
        %v352 = vcvt.s32.f32 %v345
        %v353 = vmul.f32 %v352, %v350
        %v354 = vxor.u32 %v353, 2147483648
        %v355 = vsel %vm234, %v354, %v353
        %v356 = vsub.s32 4, %v332
        %v357 = vsel %vm234, %v356, %v332
        %v358 = vsel %vm233, %v216, %v355
        %v359 = vsel %vm233, 0, %v357
        %v360 = vmul.f32 %v358, %v358
        %v361 = vmul.f32 %v360, -0.001358992
        %v362 = vadd.f32 %v361, 0.041655596
        %v363 = vmul.f32 %v360, %v362
        %v364 = vadd.f32 %v363, -0.4999988
        %v365 = vmul.f32 %v360, %v364
        %v366 = vadd.f32 1.0, %v365
        %v367 = vmul.f32 %v358, %v358
        %v368 = vmul.f32 %v367, -0.00019511016
        %v369 = vadd.f32 %v368, 0.008332121
        %v370 = vmul.f32 %v367, %v369
        %v371 = vadd.f32 %v370, -0.16666654
        %v372 = vmul.f32 %v367, %v371
        %v373 = vadd.f32 %v372, 1.0
        %v374 = vmul.f32 %v373, %v358
        %vm375 = vweird.f32 %v216
        %v376 = vadd.s32 %v359, 3
        %v377 = vand.u32 %v376, 3
        %vm378 = vcmp.lt.s32.totalorder %v377, 2
        %vm379 = vcmp.eq.s32.totalorder %v377, 0
        %v380 = vxor.u32 %v374, 2147483648
        %v381 = vsel %vm379, %v366, %v380
        %vm382 = vcmp.eq.s32.totalorder %v377, 2
        %v383 = vxor.u32 %v366, 2147483648
        %v384 = vsel %vm382, %v383, %v374
        %v385 = vsel %vm378, %v381, %v384
        %v386 = vsel %vm375, nan, %v385
        %v387 = vand.u32 2147483647, %v217
        %vm388 = vcmp.le.f32.partialorder %v387, 0.7853982
        %vm389 = vcmp.lt.s32.totalorder %v217, 0
        %v390 = vand.u32 %v217, 2139095040
        %v391 = vshrl.u32 %v390, 23
        %v392 = vsub.s32 %v391, 127
        %v393 = vand.u32 2147483647, %v217
        %v394 = vand.u32 %v393, 8388607
        %v395 = vor.u32 %v394, 8388608
        %v396 = vsub.s32 0, %v395
        %v397 = vadd.s32 %v392, 1
        %vm398 = vcmp.gt.s32.totalorder %v397, 0
        %v399 = vsel %vm398, %v397, 0
        %v400 = vshrl.u32 %v399, 5
        %v401 = vand.u32 %v399, 31
        %v402 = vsub.s32 32, %v401
        %v403 = vshrl.u32 683565275, %v402
        %v404 = vshll.u32 683565275, %v401
        %v405 = vshrl.u32 2475754826, %v402
        %v406 = vor.u32 %v404, %v405
        %v407 = vshll.u32 2475754826, %v401
        %v408 = vshrl.u32 2131351028, %v402
        %v409 = vor.u32 %v407, %v408
        %v410 = vshll.u32 2131351028, %v401
        %v411 = vshrl.u32 2102212464, %v402
        %v412 = vor.u32 %v410, %v411
        %v413 = vshll.u32 2102212464, %v401
        %v414 = vshrl.u32 920167782, %v402
        %v415 = vor.u32 %v413, %v414
        %v416 = vshll.u32 920167782, %v401
        %v417 = vshrl.u32 1326507024, %v402
        %v418 = vor.u32 %v416, %v417
        %vm419 = vcmp.lt.s32.totalorder %v400, 1
        %vm420 = vcmp.lt.s32.totalorder %v400, 2
        %vm421 = vcmp.lt.s32.totalorder %v400, 3
        %vm422 = vcmp.lt.s32.totalorder %v400, 4
        %v423 = vsel %vm419, %v403, %v406
        %v424 = vsel %vm422, %v412, 2102212464
        %v425 = vsel %vm421, %v409, %v424
        %v426 = vsel %vm420, %v423, %v425
        %v427 = vsel %vm419, %v406, %v409
        %v428 = vsel %vm422, %v415, 920167782
        %v429 = vsel %vm421, %v412, %v428
        %v430 = vsel %vm420, %v427, %v429
        %v431 = vsel %vm419, %v409, %v412
        %v432 = vsel %vm422, %v418, 1326507024
        %v433 = vsel %vm421, %v415, %v432
        %v434 = vsel %vm420, %v431, %v433
        %v435 = vshll.u32 %v395, 8
        %v436 = vand.u32 %v435, 65535
        %v437 = vshrl.u32 %v435, 16
        %v438 = vand.u32 %v434, 65535
        %v439 = vshrl.u32 %v434, 16
        %v440 = vmul.u32 %v436, %v438
        %v441 = vmul.u32 %v436, %v439
        %v442 = vmul.u32 %v437, %v438
        %v443 = vmul.u32 %v437, %v439
        %v444 = vshll.u32 %v441, 16
        %v445 = vshrl.u32 %v441, 16
        %v446 = vshll.u32 %v442, 16
        %v447 = vshrl.u32 %v442, 16
        %vm448 = vc.u32 %v440, %v444
        %v449 = vsel %vm448, 1, 0
        %v450 = vadd.s32 %v440, %v444
        %v451 = vadd.s32 %v443, %v449
        %vm452 = vc.u32 %v450, %v446
        %v453 = vsel %vm452, 1, 0
        %v454 = vadd.s32 %v450, %v446
        %v455 = vadd.s32 %v451, %v453
        %v456 = vadd.s32 %v455, %v445
        %v457 = vadd.s32 %v456, %v447
        %v458 = vand.u32 %v435, 65535
        %v459 = vshrl.u32 %v435, 16
        %v460 = vand.u32 %v430, 65535
        %v461 = vshrl.u32 %v430, 16
        %v462 = vmul.u32 %v458, %v460
        %v463 = vmul.u32 %v458, %v461
        %v464 = vmul.u32 %v459, %v460
        %v465 = vmul.u32 %v459, %v461
        %v466 = vshll.u32 %v463, 16
        %v467 = vshrl.u32 %v463, 16
        %v468 = vshll.u32 %v464, 16
        %v469 = vshrl.u32 %v464, 16
        %vm470 = vc.u32 %v462, %v466
        %v471 = vsel %vm470, 1, 0
        %v472 = vadd.s32 %v462, %v466
        %v473 = vadd.s32 %v465, %v471
        %vm474 = vc.u32 %v472, %v468
        %v475 = vsel %vm474, 1, 0
        %v476 = vadd.s32 %v472, %v468
        %v477 = vadd.s32 %v473, %v475
        %v478 = vadd.s32 %v477, %v467
        %v479 = vadd.s32 %v478, %v469
        %v480 = vmul.u32 %v435, %v426
        %v481 = vadd.s32 %v457, %v476
        %vm482 = vc.u32 %v457, %v476
        %v483 = vadd.s32 %v479, 1
        %v484 = vsel %vm482, %v483, %v479
        %v485 = vadd.s32 %v480, %v484
        %v486 = vadd.s32 %v485, 536870912
        %v487 = vshrl.u32 %v486, 30
        %v488 = vshll.u32 %v487, 30
        %v489 = vsub.s32 %v485, %v488
        %vm490 = vcmp.lt.s32.totalorder %v489, 0
        %v491 = vsub.s32 0, %v489
        %v492 = vsel %vm490, %v491, %v489
        %v493 = vclz %v492
        %v494 = vsub.s32 %v493, 2
        %vm495 = vcmp.gt.s32.totalorder 0, %v494
        %v496 = vsel %vm495, 0, %v494
        %v497 = vsub.s32 32, %v496
        %v498 = vshll.u32 %v489, %v496
        %v499 = vshrl.u32 %v481, %v497
        %v500 = vor.u32 %v498, %v499
        %v501 = vsub.s32 4294967266, %v496
        %v502 = vadd.s32 %v501, 127
        %v503 = vshll.u32 %v502, 23
        %v504 = vor.u32 4788187, %v503
        %v505 = vand.u32 2147483647, %v504
        %v507 = vcvt.s32.f32 %v500
        %v508 = vmul.f32 %v507, %v505
        %v509 = vxor.u32 %v508, 2147483648
        %v510 = vsel %vm389, %v509, %v508
        %v511 = vsub.s32 4, %v487
        %v512 = vsel %vm389, %v511, %v487
        %v513 = vsel %vm388, %v217, %v510
        %v514 = vsel %vm388, 0, %v512
        %v515 = vmul.f32 %v513, %v513
        %v516 = vmul.f32 %v515, -0.001358992
        %v517 = vadd.f32 %v516, 0.041655596
        %v518 = vmul.f32 %v515, %v517
        %v519 = vadd.f32 %v518, -0.4999988
        %v520 = vmul.f32 %v515, %v519
        %v521 = vadd.f32 1.0, %v520
        %v522 = vmul.f32 %v513, %v513
        %v523 = vmul.f32 %v522, -0.00019511016
        %v524 = vadd.f32 %v523, 0.008332121
        %v525 = vmul.f32 %v522, %v524
        %v526 = vadd.f32 %v525, -0.16666654
        %v527 = vmul.f32 %v522, %v526
        %v528 = vadd.f32 %v527, 1.0
        %v529 = vmul.f32 %v528, %v513
        %vm530 = vweird.f32 %v217
        %v531 = vadd.s32 %v514, 3
        %v532 = vand.u32 %v531, 3
        %vm533 = vcmp.lt.s32.totalorder %v532, 2
        %vm534 = vcmp.eq.s32.totalorder %v532, 0
        %v535 = vxor.u32 %v529, 2147483648
        %v536 = vsel %vm534, %v521, %v535
        %vm537 = vcmp.eq.s32.totalorder %v532, 2
        %v538 = vxor.u32 %v521, 2147483648
        %v539 = vsel %vm537, %v538, %v529
        %v540 = vsel %vm533, %v536, %v539
        %v541 = vsel %vm530, nan, %v540
        %v542 = vand.u32 2147483647, %v218
        %vm543 = vcmp.le.f32.partialorder %v542, 0.7853982
        %vm544 = vcmp.lt.s32.totalorder %v218, 0
        %v545 = vand.u32 %v218, 2139095040
        %v546 = vshrl.u32 %v545, 23
        %v547 = vsub.s32 %v546, 127
        %v548 = vand.u32 2147483647, %v218
        %v549 = vand.u32 %v548, 8388607
        %v550 = vor.u32 %v549, 8388608
        %v551 = vsub.s32 0, %v550
        %v552 = vadd.s32 %v547, 1
        %vm553 = vcmp.gt.s32.totalorder %v552, 0
        %v554 = vsel %vm553, %v552, 0
        %v555 = vshrl.u32 %v554, 5
        %v556 = vand.u32 %v554, 31
        %v557 = vsub.s32 32, %v556
        %v558 = vshrl.u32 683565275, %v557
        %v559 = vshll.u32 683565275, %v556
        %v560 = vshrl.u32 2475754826, %v557
        %v561 = vor.u32 %v559, %v560
        %v562 = vshll.u32 2475754826, %v556
        %v563 = vshrl.u32 2131351028, %v557
        %v564 = vor.u32 %v562, %v563
        %v565 = vshll.u32 2131351028, %v556
        %v566 = vshrl.u32 2102212464, %v557
        %v567 = vor.u32 %v565, %v566
        %v568 = vshll.u32 2102212464, %v556
        %v569 = vshrl.u32 920167782, %v557
        %v570 = vor.u32 %v568, %v569
        %v571 = vshll.u32 920167782, %v556
        %v572 = vshrl.u32 1326507024, %v557
        %v573 = vor.u32 %v571, %v572
        %vm574 = vcmp.lt.s32.totalorder %v555, 1
        %vm575 = vcmp.lt.s32.totalorder %v555, 2
        %vm576 = vcmp.lt.s32.totalorder %v555, 3
        %vm577 = vcmp.lt.s32.totalorder %v555, 4
        %v578 = vsel %vm574, %v558, %v561
        %v579 = vsel %vm577, %v567, 2102212464
        %v580 = vsel %vm576, %v564, %v579
        %v581 = vsel %vm575, %v578, %v580
        %v582 = vsel %vm574, %v561, %v564
        %v583 = vsel %vm577, %v570, 920167782
        %v584 = vsel %vm576, %v567, %v583
        %v585 = vsel %vm575, %v582, %v584
        %v586 = vsel %vm574, %v564, %v567
        %v587 = vsel %vm577, %v573, 1326507024
        %v588 = vsel %vm576, %v570, %v587
        %v589 = vsel %vm575, %v586, %v588
        %v590 = vshll.u32 %v550, 8
        %v591 = vand.u32 %v590, 65535
        %v592 = vshrl.u32 %v590, 16
        %v593 = vand.u32 %v589, 65535
        %v594 = vshrl.u32 %v589, 16
        %v595 = vmul.u32 %v591, %v593
        %v596 = vmul.u32 %v591, %v594
        %v597 = vmul.u32 %v592, %v593
        %v598 = vmul.u32 %v592, %v594
        %v599 = vshll.u32 %v596, 16
        %v600 = vshrl.u32 %v596, 16
        %v601 = vshll.u32 %v597, 16
        %v602 = vshrl.u32 %v597, 16
        %vm603 = vc.u32 %v595, %v599
        %v604 = vsel %vm603, 1, 0
        %v605 = vadd.s32 %v595, %v599
        %v606 = vadd.s32 %v598, %v604
        %vm607 = vc.u32 %v605, %v601
        %v608 = vsel %vm607, 1, 0
        %v609 = vadd.s32 %v605, %v601
        %v610 = vadd.s32 %v606, %v608
        %v611 = vadd.s32 %v610, %v600
        %v612 = vadd.s32 %v611, %v602
        %v613 = vand.u32 %v590, 65535
        %v614 = vshrl.u32 %v590, 16
        %v615 = vand.u32 %v585, 65535
        %v616 = vshrl.u32 %v585, 16
        %v617 = vmul.u32 %v613, %v615
        %v618 = vmul.u32 %v613, %v616
        %v619 = vmul.u32 %v614, %v615
        %v620 = vmul.u32 %v614, %v616
        %v621 = vshll.u32 %v618, 16
        %v622 = vshrl.u32 %v618, 16
        %v623 = vshll.u32 %v619, 16
        %v624 = vshrl.u32 %v619, 16
        %vm625 = vc.u32 %v617, %v621
        %v626 = vsel %vm625, 1, 0
        %v627 = vadd.s32 %v617, %v621
        %v628 = vadd.s32 %v620, %v626
        %vm629 = vc.u32 %v627, %v623
        %v630 = vsel %vm629, 1, 0
        %v631 = vadd.s32 %v627, %v623
        %v632 = vadd.s32 %v628, %v630
        %v633 = vadd.s32 %v632, %v622
        %v634 = vadd.s32 %v633, %v624
        %v635 = vmul.u32 %v590, %v581
        %v636 = vadd.s32 %v612, %v631
        %vm637 = vc.u32 %v612, %v631
        %v638 = vadd.s32 %v634, 1
        %v639 = vsel %vm637, %v638, %v634
        %v640 = vadd.s32 %v635, %v639
        %v641 = vadd.s32 %v640, 536870912
        %v642 = vshrl.u32 %v641, 30
        %v643 = vshll.u32 %v642, 30
        %v644 = vsub.s32 %v640, %v643
        %vm645 = vcmp.lt.s32.totalorder %v644, 0
        %v646 = vsub.s32 0, %v644
        %v647 = vsel %vm645, %v646, %v644
        %v648 = vclz %v647
        %v649 = vsub.s32 %v648, 2
        %vm650 = vcmp.gt.s32.totalorder 0, %v649
        %v651 = vsel %vm650, 0, %v649
        %v652 = vsub.s32 32, %v651
        %v653 = vshll.u32 %v644, %v651
        %v654 = vshrl.u32 %v636, %v652
        %v655 = vor.u32 %v653, %v654
        %v656 = vsub.s32 4294967266, %v651
        %v657 = vadd.s32 %v656, 127
        %v658 = vshll.u32 %v657, 23
        %v659 = vor.u32 4788187, %v658
        %v660 = vand.u32 2147483647, %v659
        %v662 = vcvt.s32.f32 %v655
        %v663 = vmul.f32 %v662, %v660
        %v664 = vxor.u32 %v663, 2147483648
        %v665 = vsel %vm544, %v664, %v663
        %v666 = vsub.s32 4, %v642
        %v667 = vsel %vm544, %v666, %v642
        %v668 = vsel %vm543, %v218, %v665
        %v669 = vsel %vm543, 0, %v667
        %v670 = vmul.f32 %v668, %v668
        %v671 = vmul.f32 %v670, -0.001358992
        %v672 = vadd.f32 %v671, 0.041655596
        %v673 = vmul.f32 %v670, %v672
        %v674 = vadd.f32 %v673, -0.4999988
        %v675 = vmul.f32 %v670, %v674
        %v676 = vadd.f32 1.0, %v675
        %v677 = vmul.f32 %v668, %v668
        %v678 = vmul.f32 %v677, -0.00019511016
        %v679 = vadd.f32 %v678, 0.008332121
        %v680 = vmul.f32 %v677, %v679
        %v681 = vadd.f32 %v680, -0.16666654
        %v682 = vmul.f32 %v677, %v681
        %v683 = vadd.f32 %v682, 1.0
        %v684 = vmul.f32 %v683, %v668
        %vm685 = vweird.f32 %v218
        %v686 = vadd.s32 %v669, 3
        %v687 = vand.u32 %v686, 3
        %vm688 = vcmp.lt.s32.totalorder %v687, 2
        %vm689 = vcmp.eq.s32.totalorder %v687, 0
        %v690 = vxor.u32 %v684, 2147483648
        %v691 = vsel %vm689, %v676, %v690
        %vm692 = vcmp.eq.s32.totalorder %v687, 2
        %v693 = vxor.u32 %v676, 2147483648
        %v694 = vsel %vm692, %v693, %v684
        %v695 = vsel %vm688, %v691, %v694
        %v696 = vsel %vm685, nan, %v695
        %v697 = vand.u32 2147483647, %v219
        %vm698 = vcmp.le.f32.partialorder %v697, 0.7853982
        %vm699 = vcmp.lt.s32.totalorder %v219, 0
        %v700 = vand.u32 %v219, 2139095040
        %v701 = vshrl.u32 %v700, 23
        %v702 = vsub.s32 %v701, 127
        %v703 = vand.u32 2147483647, %v219
        %v704 = vand.u32 %v703, 8388607
        %v705 = vor.u32 %v704, 8388608
        %v706 = vsub.s32 0, %v705
        %v707 = vadd.s32 %v702, 1
        %vm708 = vcmp.gt.s32.totalorder %v707, 0
        %v709 = vsel %vm708, %v707, 0
        %v710 = vshrl.u32 %v709, 5
        %v711 = vand.u32 %v709, 31
        %v712 = vsub.s32 32, %v711
        %v713 = vshrl.u32 683565275, %v712
        %v714 = vshll.u32 683565275, %v711
        %v715 = vshrl.u32 2475754826, %v712
        %v716 = vor.u32 %v714, %v715
        %v717 = vshll.u32 2475754826, %v711
        %v718 = vshrl.u32 2131351028, %v712
        %v719 = vor.u32 %v717, %v718
        %v720 = vshll.u32 2131351028, %v711
        %v721 = vshrl.u32 2102212464, %v712
        %v722 = vor.u32 %v720, %v721
        %v723 = vshll.u32 2102212464, %v711
        %v724 = vshrl.u32 920167782, %v712
        %v725 = vor.u32 %v723, %v724
        %v726 = vshll.u32 920167782, %v711
        %v727 = vshrl.u32 1326507024, %v712
        %v728 = vor.u32 %v726, %v727
        %vm729 = vcmp.lt.s32.totalorder %v710, 1
        %vm730 = vcmp.lt.s32.totalorder %v710, 2
        %vm731 = vcmp.lt.s32.totalorder %v710, 3
        %vm732 = vcmp.lt.s32.totalorder %v710, 4
        %v733 = vsel %vm729, %v713, %v716
        %v734 = vsel %vm732, %v722, 2102212464
        %v735 = vsel %vm731, %v719, %v734
        %v736 = vsel %vm730, %v733, %v735
        %v737 = vsel %vm729, %v716, %v719
        %v738 = vsel %vm732, %v725, 920167782
        %v739 = vsel %vm731, %v722, %v738
        %v740 = vsel %vm730, %v737, %v739
        %v741 = vsel %vm729, %v719, %v722
        %v742 = vsel %vm732, %v728, 1326507024
        %v743 = vsel %vm731, %v725, %v742
        %v744 = vsel %vm730, %v741, %v743
        %v745 = vshll.u32 %v705, 8
        %v746 = vand.u32 %v745, 65535
        %v747 = vshrl.u32 %v745, 16
        %v748 = vand.u32 %v744, 65535
        %v749 = vshrl.u32 %v744, 16
        %v750 = vmul.u32 %v746, %v748
        %v751 = vmul.u32 %v746, %v749
        %v752 = vmul.u32 %v747, %v748
        %v753 = vmul.u32 %v747, %v749
        %v754 = vshll.u32 %v751, 16
        %v755 = vshrl.u32 %v751, 16
        %v756 = vshll.u32 %v752, 16
        %v757 = vshrl.u32 %v752, 16
        %vm758 = vc.u32 %v750, %v754
        %v759 = vsel %vm758, 1, 0
        %v760 = vadd.s32 %v750, %v754
        %v761 = vadd.s32 %v753, %v759
        %vm762 = vc.u32 %v760, %v756
        %v763 = vsel %vm762, 1, 0
        %v764 = vadd.s32 %v760, %v756
        %v765 = vadd.s32 %v761, %v763
        %v766 = vadd.s32 %v765, %v755
        %v767 = vadd.s32 %v766, %v757
        %v768 = vand.u32 %v745, 65535
        %v769 = vshrl.u32 %v745, 16
        %v770 = vand.u32 %v740, 65535
        %v771 = vshrl.u32 %v740, 16
        %v772 = vmul.u32 %v768, %v770
        %v773 = vmul.u32 %v768, %v771
        %v774 = vmul.u32 %v769, %v770
        %v775 = vmul.u32 %v769, %v771
        %v776 = vshll.u32 %v773, 16
        %v777 = vshrl.u32 %v773, 16
        %v778 = vshll.u32 %v774, 16
        %v779 = vshrl.u32 %v774, 16
        %vm780 = vc.u32 %v772, %v776
        %v781 = vsel %vm780, 1, 0
        %v782 = vadd.s32 %v772, %v776
        %v783 = vadd.s32 %v775, %v781
        %vm784 = vc.u32 %v782, %v778
        %v785 = vsel %vm784, 1, 0
        %v786 = vadd.s32 %v782, %v778
        %v787 = vadd.s32 %v783, %v785
        %v788 = vadd.s32 %v787, %v777
        %v789 = vadd.s32 %v788, %v779
        %v790 = vmul.u32 %v745, %v736
        %v791 = vadd.s32 %v767, %v786
        %vm792 = vc.u32 %v767, %v786
        %v793 = vadd.s32 %v789, 1
        %v794 = vsel %vm792, %v793, %v789
        %v795 = vadd.s32 %v790, %v794
        %v796 = vadd.s32 %v795, 536870912
        %v797 = vshrl.u32 %v796, 30
        %v798 = vshll.u32 %v797, 30
        %v799 = vsub.s32 %v795, %v798
        %vm800 = vcmp.lt.s32.totalorder %v799, 0
        %v801 = vsub.s32 0, %v799
        %v802 = vsel %vm800, %v801, %v799
        %v803 = vclz %v802
        %v804 = vsub.s32 %v803, 2
        %vm805 = vcmp.gt.s32.totalorder 0, %v804
        %v806 = vsel %vm805, 0, %v804
        %v807 = vsub.s32 32, %v806
        %v808 = vshll.u32 %v799, %v806
        %v809 = vshrl.u32 %v791, %v807
        %v810 = vor.u32 %v808, %v809
        %v811 = vsub.s32 4294967266, %v806
        %v812 = vadd.s32 %v811, 127
        %v813 = vshll.u32 %v812, 23
        %v814 = vor.u32 4788187, %v813
        %v815 = vand.u32 2147483647, %v814
        %v817 = vcvt.s32.f32 %v810
        %v818 = vmul.f32 %v817, %v815
        %v819 = vxor.u32 %v818, 2147483648
        %v820 = vsel %vm699, %v819, %v818
        %v821 = vsub.s32 4, %v797
        %v822 = vsel %vm699, %v821, %v797
        %v823 = vsel %vm698, %v219, %v820
        %v824 = vsel %vm698, 0, %v822
        %v825 = vmul.f32 %v823, %v823
        %v826 = vmul.f32 %v825, -0.001358992
        %v827 = vadd.f32 %v826, 0.041655596
        %v828 = vmul.f32 %v825, %v827
        %v829 = vadd.f32 %v828, -0.4999988
        %v830 = vmul.f32 %v825, %v829
        %v831 = vadd.f32 1.0, %v830
        %v832 = vmul.f32 %v823, %v823
        %v833 = vmul.f32 %v832, -0.00019511016
        %v834 = vadd.f32 %v833, 0.008332121
        %v835 = vmul.f32 %v832, %v834
        %v836 = vadd.f32 %v835, -0.16666654
        %v837 = vmul.f32 %v832, %v836
        %v838 = vadd.f32 %v837, 1.0
        %v839 = vmul.f32 %v838, %v823
        %vm840 = vweird.f32 %v219
        %v841 = vadd.s32 %v824, 3
        %v842 = vand.u32 %v841, 3
        %vm843 = vcmp.lt.s32.totalorder %v842, 2
        %vm844 = vcmp.eq.s32.totalorder %v842, 0
        %v845 = vxor.u32 %v839, 2147483648
        %v846 = vsel %vm844, %v831, %v845
        %vm847 = vcmp.eq.s32.totalorder %v842, 2
        %v848 = vxor.u32 %v831, 2147483648
        %v849 = vsel %vm847, %v848, %v839
        %v850 = vsel %vm843, %v846, %v849
        %v851 = vsel %vm840, nan, %v850
        %v852 = vand.u32 2147483647, %v220
        %vm853 = vcmp.le.f32.partialorder %v852, 0.7853982
        %vm854 = vcmp.lt.s32.totalorder %v220, 0
        %v855 = vand.u32 %v220, 2139095040
        %v856 = vshrl.u32 %v855, 23
        %v857 = vsub.s32 %v856, 127
        %v858 = vand.u32 2147483647, %v220
        %v859 = vand.u32 %v858, 8388607
        %v860 = vor.u32 %v859, 8388608
        %v861 = vsub.s32 0, %v860
        %v862 = vadd.s32 %v857, 1
        %vm863 = vcmp.gt.s32.totalorder %v862, 0
        %v864 = vsel %vm863, %v862, 0
        %v865 = vshrl.u32 %v864, 5
        %v866 = vand.u32 %v864, 31
        %v867 = vsub.s32 32, %v866
        %v868 = vshrl.u32 683565275, %v867
        %v869 = vshll.u32 683565275, %v866
        %v870 = vshrl.u32 2475754826, %v867
        %v871 = vor.u32 %v869, %v870
        %v872 = vshll.u32 2475754826, %v866
        %v873 = vshrl.u32 2131351028, %v867
        %v874 = vor.u32 %v872, %v873
        %v875 = vshll.u32 2131351028, %v866
        %v876 = vshrl.u32 2102212464, %v867
        %v877 = vor.u32 %v875, %v876
        %v878 = vshll.u32 2102212464, %v866
        %v879 = vshrl.u32 920167782, %v867
        %v880 = vor.u32 %v878, %v879
        %v881 = vshll.u32 920167782, %v866
        %v882 = vshrl.u32 1326507024, %v867
        %v883 = vor.u32 %v881, %v882
        %vm884 = vcmp.lt.s32.totalorder %v865, 1
        %vm885 = vcmp.lt.s32.totalorder %v865, 2
        %vm886 = vcmp.lt.s32.totalorder %v865, 3
        %vm887 = vcmp.lt.s32.totalorder %v865, 4
        %v888 = vsel %vm884, %v868, %v871
        %v889 = vsel %vm887, %v877, 2102212464
        %v890 = vsel %vm886, %v874, %v889
        %v891 = vsel %vm885, %v888, %v890
        %v892 = vsel %vm884, %v871, %v874
        %v893 = vsel %vm887, %v880, 920167782
        %v894 = vsel %vm886, %v877, %v893
        %v895 = vsel %vm885, %v892, %v894
        %v896 = vsel %vm884, %v874, %v877
        %v897 = vsel %vm887, %v883, 1326507024
        %v898 = vsel %vm886, %v880, %v897
        %v899 = vsel %vm885, %v896, %v898
        %v900 = vshll.u32 %v860, 8
        %v901 = vand.u32 %v900, 65535
        %v902 = vshrl.u32 %v900, 16
        %v903 = vand.u32 %v899, 65535
        %v904 = vshrl.u32 %v899, 16
        %v905 = vmul.u32 %v901, %v903
        %v906 = vmul.u32 %v901, %v904
        %v907 = vmul.u32 %v902, %v903
        %v908 = vmul.u32 %v902, %v904
        %v909 = vshll.u32 %v906, 16
        %v910 = vshrl.u32 %v906, 16
        %v911 = vshll.u32 %v907, 16
        %v912 = vshrl.u32 %v907, 16
        %vm913 = vc.u32 %v905, %v909
        %v914 = vsel %vm913, 1, 0
        %v915 = vadd.s32 %v905, %v909
        %v916 = vadd.s32 %v908, %v914
        %vm917 = vc.u32 %v915, %v911
        %v918 = vsel %vm917, 1, 0
        %v919 = vadd.s32 %v915, %v911
        %v920 = vadd.s32 %v916, %v918
        %v921 = vadd.s32 %v920, %v910
        %v922 = vadd.s32 %v921, %v912
        %v923 = vand.u32 %v900, 65535
        %v924 = vshrl.u32 %v900, 16
        %v925 = vand.u32 %v895, 65535
        %v926 = vshrl.u32 %v895, 16
        %v927 = vmul.u32 %v923, %v925
        %v928 = vmul.u32 %v923, %v926
        %v929 = vmul.u32 %v924, %v925
        %v930 = vmul.u32 %v924, %v926
        %v931 = vshll.u32 %v928, 16
        %v932 = vshrl.u32 %v928, 16
        %v933 = vshll.u32 %v929, 16
        %v934 = vshrl.u32 %v929, 16
        %vm935 = vc.u32 %v927, %v931
        %v936 = vsel %vm935, 1, 0
        %v937 = vadd.s32 %v927, %v931
        %v938 = vadd.s32 %v930, %v936
        %vm939 = vc.u32 %v937, %v933
        %v940 = vsel %vm939, 1, 0
        %v941 = vadd.s32 %v937, %v933
        %v942 = vadd.s32 %v938, %v940
        %v943 = vadd.s32 %v942, %v932
        %v944 = vadd.s32 %v943, %v934
        %v945 = vmul.u32 %v900, %v891
        %v946 = vadd.s32 %v922, %v941
        %vm947 = vc.u32 %v922, %v941
        %v948 = vadd.s32 %v944, 1
        %v949 = vsel %vm947, %v948, %v944
        %v950 = vadd.s32 %v945, %v949
        %v951 = vadd.s32 %v950, 536870912
        %v952 = vshrl.u32 %v951, 30
        %v953 = vshll.u32 %v952, 30
        %v954 = vsub.s32 %v950, %v953
        %vm955 = vcmp.lt.s32.totalorder %v954, 0
        %v956 = vsub.s32 0, %v954
        %v957 = vsel %vm955, %v956, %v954
        %v958 = vclz %v957
        %v959 = vsub.s32 %v958, 2
        %vm960 = vcmp.gt.s32.totalorder 0, %v959
        %v961 = vsel %vm960, 0, %v959
        %v962 = vsub.s32 32, %v961
        %v963 = vshll.u32 %v954, %v961
        %v964 = vshrl.u32 %v946, %v962
        %v965 = vor.u32 %v963, %v964
        %v966 = vsub.s32 4294967266, %v961
        %v967 = vadd.s32 %v966, 127
        %v968 = vshll.u32 %v967, 23
        %v969 = vor.u32 4788187, %v968
        %v970 = vand.u32 2147483647, %v969
        %v972 = vcvt.s32.f32 %v965
        %v973 = vmul.f32 %v972, %v970
        %v974 = vxor.u32 %v973, 2147483648
        %v975 = vsel %vm854, %v974, %v973
        %v976 = vsub.s32 4, %v952
        %v977 = vsel %vm854, %v976, %v952
        %v978 = vsel %vm853, %v220, %v975
        %v979 = vsel %vm853, 0, %v977
        %v980 = vmul.f32 %v978, %v978
        %v981 = vmul.f32 %v980, -0.001358992
        %v982 = vadd.f32 %v981, 0.041655596
        %v983 = vmul.f32 %v980, %v982
        %v984 = vadd.f32 %v983, -0.4999988
        %v985 = vmul.f32 %v980, %v984
        %v986 = vadd.f32 1.0, %v985
        %v987 = vmul.f32 %v978, %v978
        %v988 = vmul.f32 %v987, -0.00019511016
        %v989 = vadd.f32 %v988, 0.008332121
        %v990 = vmul.f32 %v987, %v989
        %v991 = vadd.f32 %v990, -0.16666654
        %v992 = vmul.f32 %v987, %v991
        %v993 = vadd.f32 %v992, 1.0
        %v994 = vmul.f32 %v993, %v978
        %vm995 = vweird.f32 %v220
        %v996 = vadd.s32 %v979, 3
        %v997 = vand.u32 %v996, 3
        %vm998 = vcmp.lt.s32.totalorder %v997, 2
        %vm999 = vcmp.eq.s32.totalorder %v997, 0
        %v1000 = vxor.u32 %v994, 2147483648
        %v1001 = vsel %vm999, %v986, %v1000
        %vm1002 = vcmp.eq.s32.totalorder %v997, 2
        %v1003 = vxor.u32 %v986, 2147483648
        %v1004 = vsel %vm1002, %v1003, %v994
        %v1005 = vsel %vm998, %v1001, %v1004
        %v1006 = vsel %vm995, nan, %v1005
        %v1007 = vand.u32 2147483647, %v221
        %vm1008 = vcmp.le.f32.partialorder %v1007, 0.7853982
        %vm1009 = vcmp.lt.s32.totalorder %v221, 0
        %v1010 = vand.u32 %v221, 2139095040
        %v1011 = vshrl.u32 %v1010, 23
        %v1012 = vsub.s32 %v1011, 127
        %v1013 = vand.u32 2147483647, %v221
        %v1014 = vand.u32 %v1013, 8388607
        %v1015 = vor.u32 %v1014, 8388608
        %v1016 = vsub.s32 0, %v1015
        %v1017 = vadd.s32 %v1012, 1
        %vm1018 = vcmp.gt.s32.totalorder %v1017, 0
        %v1019 = vsel %vm1018, %v1017, 0
        %v1020 = vshrl.u32 %v1019, 5
        %v1021 = vand.u32 %v1019, 31
        %v1022 = vsub.s32 32, %v1021
        %v1023 = vshrl.u32 683565275, %v1022
        %v1024 = vshll.u32 683565275, %v1021
        %v1025 = vshrl.u32 2475754826, %v1022
        %v1026 = vor.u32 %v1024, %v1025
        %v1027 = vshll.u32 2475754826, %v1021
        %v1028 = vshrl.u32 2131351028, %v1022
        %v1029 = vor.u32 %v1027, %v1028
        %v1030 = vshll.u32 2131351028, %v1021
        %v1031 = vshrl.u32 2102212464, %v1022
        %v1032 = vor.u32 %v1030, %v1031
        %v1033 = vshll.u32 2102212464, %v1021
        %v1034 = vshrl.u32 920167782, %v1022
        %v1035 = vor.u32 %v1033, %v1034
        %v1036 = vshll.u32 920167782, %v1021
        %v1037 = vshrl.u32 1326507024, %v1022
        %v1038 = vor.u32 %v1036, %v1037
        %vm1039 = vcmp.lt.s32.totalorder %v1020, 1
        %vm1040 = vcmp.lt.s32.totalorder %v1020, 2
        %vm1041 = vcmp.lt.s32.totalorder %v1020, 3
        %vm1042 = vcmp.lt.s32.totalorder %v1020, 4
        %v1043 = vsel %vm1039, %v1023, %v1026
        %v1044 = vsel %vm1042, %v1032, 2102212464
        %v1045 = vsel %vm1041, %v1029, %v1044
        %v1046 = vsel %vm1040, %v1043, %v1045
        %v1047 = vsel %vm1039, %v1026, %v1029
        %v1048 = vsel %vm1042, %v1035, 920167782
        %v1049 = vsel %vm1041, %v1032, %v1048
        %v1050 = vsel %vm1040, %v1047, %v1049
        %v1051 = vsel %vm1039, %v1029, %v1032
        %v1052 = vsel %vm1042, %v1038, 1326507024
        %v1053 = vsel %vm1041, %v1035, %v1052
        %v1054 = vsel %vm1040, %v1051, %v1053
        %v1055 = vshll.u32 %v1015, 8
        %v1056 = vand.u32 %v1055, 65535
        %v1057 = vshrl.u32 %v1055, 16
        %v1058 = vand.u32 %v1054, 65535
        %v1059 = vshrl.u32 %v1054, 16
        %v1060 = vmul.u32 %v1056, %v1058
        %v1061 = vmul.u32 %v1056, %v1059
        %v1062 = vmul.u32 %v1057, %v1058
        %v1063 = vmul.u32 %v1057, %v1059
        %v1064 = vshll.u32 %v1061, 16
        %v1065 = vshrl.u32 %v1061, 16
        %v1066 = vshll.u32 %v1062, 16
        %v1067 = vshrl.u32 %v1062, 16
        %vm1068 = vc.u32 %v1060, %v1064
        %v1069 = vsel %vm1068, 1, 0
        %v1070 = vadd.s32 %v1060, %v1064
        %v1071 = vadd.s32 %v1063, %v1069
        %vm1072 = vc.u32 %v1070, %v1066
        %v1073 = vsel %vm1072, 1, 0
        %v1074 = vadd.s32 %v1070, %v1066
        %v1075 = vadd.s32 %v1071, %v1073
        %v1076 = vadd.s32 %v1075, %v1065
        %v1077 = vadd.s32 %v1076, %v1067
        %v1078 = vand.u32 %v1055, 65535
        %v1079 = vshrl.u32 %v1055, 16
        %v1080 = vand.u32 %v1050, 65535
        %v1081 = vshrl.u32 %v1050, 16
        %v1082 = vmul.u32 %v1078, %v1080
        %v1083 = vmul.u32 %v1078, %v1081
        %v1084 = vmul.u32 %v1079, %v1080
        %v1085 = vmul.u32 %v1079, %v1081
        %v1086 = vshll.u32 %v1083, 16
        %v1087 = vshrl.u32 %v1083, 16
        %v1088 = vshll.u32 %v1084, 16
        %v1089 = vshrl.u32 %v1084, 16
        %vm1090 = vc.u32 %v1082, %v1086
        %v1091 = vsel %vm1090, 1, 0
        %v1092 = vadd.s32 %v1082, %v1086
        %v1093 = vadd.s32 %v1085, %v1091
        %vm1094 = vc.u32 %v1092, %v1088
        %v1095 = vsel %vm1094, 1, 0
        %v1096 = vadd.s32 %v1092, %v1088
        %v1097 = vadd.s32 %v1093, %v1095
        %v1098 = vadd.s32 %v1097, %v1087
        %v1099 = vadd.s32 %v1098, %v1089
        %v1100 = vmul.u32 %v1055, %v1046
        %v1101 = vadd.s32 %v1077, %v1096
        %vm1102 = vc.u32 %v1077, %v1096
        %v1103 = vadd.s32 %v1099, 1
        %v1104 = vsel %vm1102, %v1103, %v1099
        %v1105 = vadd.s32 %v1100, %v1104
        %v1106 = vadd.s32 %v1105, 536870912
        %v1107 = vshrl.u32 %v1106, 30
        %v1108 = vshll.u32 %v1107, 30
        %v1109 = vsub.s32 %v1105, %v1108
        %vm1110 = vcmp.lt.s32.totalorder %v1109, 0
        %v1111 = vsub.s32 0, %v1109
        %v1112 = vsel %vm1110, %v1111, %v1109
        %v1113 = vclz %v1112
        %v1114 = vsub.s32 %v1113, 2
        %vm1115 = vcmp.gt.s32.totalorder 0, %v1114
        %v1116 = vsel %vm1115, 0, %v1114
        %v1117 = vsub.s32 32, %v1116
        %v1118 = vshll.u32 %v1109, %v1116
        %v1119 = vshrl.u32 %v1101, %v1117
        %v1120 = vor.u32 %v1118, %v1119
        %v1121 = vsub.s32 4294967266, %v1116
        %v1122 = vadd.s32 %v1121, 127
        %v1123 = vshll.u32 %v1122, 23
        %v1124 = vor.u32 4788187, %v1123
        %v1125 = vand.u32 2147483647, %v1124
        %v1127 = vcvt.s32.f32 %v1120
        %v1128 = vmul.f32 %v1127, %v1125
        %v1129 = vxor.u32 %v1128, 2147483648
        %v1130 = vsel %vm1009, %v1129, %v1128
        %v1131 = vsub.s32 4, %v1107
        %v1132 = vsel %vm1009, %v1131, %v1107
        %v1133 = vsel %vm1008, %v221, %v1130
        %v1134 = vsel %vm1008, 0, %v1132
        %v1135 = vmul.f32 %v1133, %v1133
        %v1136 = vmul.f32 %v1135, -0.001358992
        %v1137 = vadd.f32 %v1136, 0.041655596
        %v1138 = vmul.f32 %v1135, %v1137
        %v1139 = vadd.f32 %v1138, -0.4999988
        %v1140 = vmul.f32 %v1135, %v1139
        %v1141 = vadd.f32 1.0, %v1140
        %v1142 = vmul.f32 %v1133, %v1133
        %v1143 = vmul.f32 %v1142, -0.00019511016
        %v1144 = vadd.f32 %v1143, 0.008332121
        %v1145 = vmul.f32 %v1142, %v1144
        %v1146 = vadd.f32 %v1145, -0.16666654
        %v1147 = vmul.f32 %v1142, %v1146
        %v1148 = vadd.f32 %v1147, 1.0
        %v1149 = vmul.f32 %v1148, %v1133
        %vm1150 = vweird.f32 %v221
        %v1151 = vadd.s32 %v1134, 3
        %v1152 = vand.u32 %v1151, 3
        %vm1153 = vcmp.lt.s32.totalorder %v1152, 2
        %vm1154 = vcmp.eq.s32.totalorder %v1152, 0
        %v1155 = vxor.u32 %v1149, 2147483648
        %v1156 = vsel %vm1154, %v1141, %v1155
        %vm1157 = vcmp.eq.s32.totalorder %v1152, 2
        %v1158 = vxor.u32 %v1141, 2147483648
        %v1159 = vsel %vm1157, %v1158, %v1149
        %v1160 = vsel %vm1153, %v1156, %v1159
        %v1161 = vsel %vm1150, nan, %v1160
        %v1162 = vand.u32 2147483647, %v222
        %vm1163 = vcmp.le.f32.partialorder %v1162, 0.7853982
        %vm1164 = vcmp.lt.s32.totalorder %v222, 0
        %v1165 = vand.u32 %v222, 2139095040
        %v1166 = vshrl.u32 %v1165, 23
        %v1167 = vsub.s32 %v1166, 127
        %v1168 = vand.u32 2147483647, %v222
        %v1169 = vand.u32 %v1168, 8388607
        %v1170 = vor.u32 %v1169, 8388608
        %v1171 = vsub.s32 0, %v1170
        %v1172 = vadd.s32 %v1167, 1
        %vm1173 = vcmp.gt.s32.totalorder %v1172, 0
        %v1174 = vsel %vm1173, %v1172, 0
        %v1175 = vshrl.u32 %v1174, 5
        %v1176 = vand.u32 %v1174, 31
        %v1177 = vsub.s32 32, %v1176
        %v1178 = vshrl.u32 683565275, %v1177
        %v1179 = vshll.u32 683565275, %v1176
        %v1180 = vshrl.u32 2475754826, %v1177
        %v1181 = vor.u32 %v1179, %v1180
        %v1182 = vshll.u32 2475754826, %v1176
        %v1183 = vshrl.u32 2131351028, %v1177
        %v1184 = vor.u32 %v1182, %v1183
        %v1185 = vshll.u32 2131351028, %v1176
        %v1186 = vshrl.u32 2102212464, %v1177
        %v1187 = vor.u32 %v1185, %v1186
        %v1188 = vshll.u32 2102212464, %v1176
        %v1189 = vshrl.u32 920167782, %v1177
        %v1190 = vor.u32 %v1188, %v1189
        %v1191 = vshll.u32 920167782, %v1176
        %v1192 = vshrl.u32 1326507024, %v1177
        %v1193 = vor.u32 %v1191, %v1192
        %vm1194 = vcmp.lt.s32.totalorder %v1175, 1
        %vm1195 = vcmp.lt.s32.totalorder %v1175, 2
        %vm1196 = vcmp.lt.s32.totalorder %v1175, 3
        %vm1197 = vcmp.lt.s32.totalorder %v1175, 4
        %v1198 = vsel %vm1194, %v1178, %v1181
        %v1199 = vsel %vm1197, %v1187, 2102212464
        %v1200 = vsel %vm1196, %v1184, %v1199
        %v1201 = vsel %vm1195, %v1198, %v1200
        %v1202 = vsel %vm1194, %v1181, %v1184
        %v1203 = vsel %vm1197, %v1190, 920167782
        %v1204 = vsel %vm1196, %v1187, %v1203
        %v1205 = vsel %vm1195, %v1202, %v1204
        %v1206 = vsel %vm1194, %v1184, %v1187
        %v1207 = vsel %vm1197, %v1193, 1326507024
        %v1208 = vsel %vm1196, %v1190, %v1207
        %v1209 = vsel %vm1195, %v1206, %v1208
        %v1210 = vshll.u32 %v1170, 8
        %v1211 = vand.u32 %v1210, 65535
        %v1212 = vshrl.u32 %v1210, 16
        %v1213 = vand.u32 %v1209, 65535
        %v1214 = vshrl.u32 %v1209, 16
        %v1215 = vmul.u32 %v1211, %v1213
        %v1216 = vmul.u32 %v1211, %v1214
        %v1217 = vmul.u32 %v1212, %v1213
        %v1218 = vmul.u32 %v1212, %v1214
        %v1219 = vshll.u32 %v1216, 16
        %v1220 = vshrl.u32 %v1216, 16
        %v1221 = vshll.u32 %v1217, 16
        %v1222 = vshrl.u32 %v1217, 16
        %vm1223 = vc.u32 %v1215, %v1219
        %v1224 = vsel %vm1223, 1, 0
        %v1225 = vadd.s32 %v1215, %v1219
        %v1226 = vadd.s32 %v1218, %v1224
        %vm1227 = vc.u32 %v1225, %v1221
        %v1228 = vsel %vm1227, 1, 0
        %v1229 = vadd.s32 %v1225, %v1221
        %v1230 = vadd.s32 %v1226, %v1228
        %v1231 = vadd.s32 %v1230, %v1220
        %v1232 = vadd.s32 %v1231, %v1222
        %v1233 = vand.u32 %v1210, 65535
        %v1234 = vshrl.u32 %v1210, 16
        %v1235 = vand.u32 %v1205, 65535
        %v1236 = vshrl.u32 %v1205, 16
        %v1237 = vmul.u32 %v1233, %v1235
        %v1238 = vmul.u32 %v1233, %v1236
        %v1239 = vmul.u32 %v1234, %v1235
        %v1240 = vmul.u32 %v1234, %v1236
        %v1241 = vshll.u32 %v1238, 16
        %v1242 = vshrl.u32 %v1238, 16
        %v1243 = vshll.u32 %v1239, 16
        %v1244 = vshrl.u32 %v1239, 16
        %vm1245 = vc.u32 %v1237, %v1241
        %v1246 = vsel %vm1245, 1, 0
        %v1247 = vadd.s32 %v1237, %v1241
        %v1248 = vadd.s32 %v1240, %v1246
        %vm1249 = vc.u32 %v1247, %v1243
        %v1250 = vsel %vm1249, 1, 0
        %v1251 = vadd.s32 %v1247, %v1243
        %v1252 = vadd.s32 %v1248, %v1250
        %v1253 = vadd.s32 %v1252, %v1242
        %v1254 = vadd.s32 %v1253, %v1244
        %v1255 = vmul.u32 %v1210, %v1201
        %v1256 = vadd.s32 %v1232, %v1251
        %vm1257 = vc.u32 %v1232, %v1251
        %v1258 = vadd.s32 %v1254, 1
        %v1259 = vsel %vm1257, %v1258, %v1254
        %v1260 = vadd.s32 %v1255, %v1259
        %v1261 = vadd.s32 %v1260, 536870912
        %v1262 = vshrl.u32 %v1261, 30
        %v1263 = vshll.u32 %v1262, 30
        %v1264 = vsub.s32 %v1260, %v1263
        %vm1265 = vcmp.lt.s32.totalorder %v1264, 0
        %v1266 = vsub.s32 0, %v1264
        %v1267 = vsel %vm1265, %v1266, %v1264
        %v1268 = vclz %v1267
        %v1269 = vsub.s32 %v1268, 2
        %vm1270 = vcmp.gt.s32.totalorder 0, %v1269
        %v1271 = vsel %vm1270, 0, %v1269
        %v1272 = vsub.s32 32, %v1271
        %v1273 = vshll.u32 %v1264, %v1271
        %v1274 = vshrl.u32 %v1256, %v1272
        %v1275 = vor.u32 %v1273, %v1274
        %v1276 = vsub.s32 4294967266, %v1271
        %v1277 = vadd.s32 %v1276, 127
        %v1278 = vshll.u32 %v1277, 23
        %v1279 = vor.u32 4788187, %v1278
        %v1280 = vand.u32 2147483647, %v1279
        %v1282 = vcvt.s32.f32 %v1275
        %v1283 = vmul.f32 %v1282, %v1280
        %v1284 = vxor.u32 %v1283, 2147483648
        %v1285 = vsel %vm1164, %v1284, %v1283
        %v1286 = vsub.s32 4, %v1262
        %v1287 = vsel %vm1164, %v1286, %v1262
        %v1288 = vsel %vm1163, %v222, %v1285
        %v1289 = vsel %vm1163, 0, %v1287
        %v1290 = vmul.f32 %v1288, %v1288
        %v1291 = vmul.f32 %v1290, -0.001358992
        %v1292 = vadd.f32 %v1291, 0.041655596
        %v1293 = vmul.f32 %v1290, %v1292
        %v1294 = vadd.f32 %v1293, -0.4999988
        %v1295 = vmul.f32 %v1290, %v1294
        %v1296 = vadd.f32 1.0, %v1295
        %v1297 = vmul.f32 %v1288, %v1288
        %v1298 = vmul.f32 %v1297, -0.00019511016
        %v1299 = vadd.f32 %v1298, 0.008332121
        %v1300 = vmul.f32 %v1297, %v1299
        %v1301 = vadd.f32 %v1300, -0.16666654
        %v1302 = vmul.f32 %v1297, %v1301
        %v1303 = vadd.f32 %v1302, 1.0
        %v1304 = vmul.f32 %v1303, %v1288
        %vm1305 = vweird.f32 %v222
        %v1306 = vadd.s32 %v1289, 3
        %v1307 = vand.u32 %v1306, 3
        %vm1308 = vcmp.lt.s32.totalorder %v1307, 2
        %vm1309 = vcmp.eq.s32.totalorder %v1307, 0
        %v1310 = vxor.u32 %v1304, 2147483648
        %v1311 = vsel %vm1309, %v1296, %v1310
        %vm1312 = vcmp.eq.s32.totalorder %v1307, 2
        %v1313 = vxor.u32 %v1296, 2147483648
        %v1314 = vsel %vm1312, %v1313, %v1304
        %v1315 = vsel %vm1308, %v1311, %v1314
        %v1316 = vsel %vm1305, nan, %v1315
        %v1317 = vand.u32 2147483647, %v223
        %vm1318 = vcmp.le.f32.partialorder %v1317, 0.7853982
        %vm1319 = vcmp.lt.s32.totalorder %v223, 0
        %v1320 = vand.u32 %v223, 2139095040
        %v1321 = vshrl.u32 %v1320, 23
        %v1322 = vsub.s32 %v1321, 127
        %v1323 = vand.u32 2147483647, %v223
        %v1324 = vand.u32 %v1323, 8388607
        %v1325 = vor.u32 %v1324, 8388608
        %v1326 = vsub.s32 0, %v1325
        %v1327 = vadd.s32 %v1322, 1
        %vm1328 = vcmp.gt.s32.totalorder %v1327, 0
        %v1329 = vsel %vm1328, %v1327, 0
        %v1330 = vshrl.u32 %v1329, 5
        %v1331 = vand.u32 %v1329, 31
        %v1332 = vsub.s32 32, %v1331
        %v1333 = vshrl.u32 683565275, %v1332
        %v1334 = vshll.u32 683565275, %v1331
        %v1335 = vshrl.u32 2475754826, %v1332
        %v1336 = vor.u32 %v1334, %v1335
        %v1337 = vshll.u32 2475754826, %v1331
        %v1338 = vshrl.u32 2131351028, %v1332
        %v1339 = vor.u32 %v1337, %v1338
        %v1340 = vshll.u32 2131351028, %v1331
        %v1341 = vshrl.u32 2102212464, %v1332
        %v1342 = vor.u32 %v1340, %v1341
        %v1343 = vshll.u32 2102212464, %v1331
        %v1344 = vshrl.u32 920167782, %v1332
        %v1345 = vor.u32 %v1343, %v1344
        %v1346 = vshll.u32 920167782, %v1331
        %v1347 = vshrl.u32 1326507024, %v1332
        %v1348 = vor.u32 %v1346, %v1347
        %vm1349 = vcmp.lt.s32.totalorder %v1330, 1
        %vm1350 = vcmp.lt.s32.totalorder %v1330, 2
        %vm1351 = vcmp.lt.s32.totalorder %v1330, 3
        %vm1352 = vcmp.lt.s32.totalorder %v1330, 4
        %v1353 = vsel %vm1349, %v1333, %v1336
        %v1354 = vsel %vm1352, %v1342, 2102212464
        %v1355 = vsel %vm1351, %v1339, %v1354
        %v1356 = vsel %vm1350, %v1353, %v1355
        %v1357 = vsel %vm1349, %v1336, %v1339
        %v1358 = vsel %vm1352, %v1345, 920167782
        %v1359 = vsel %vm1351, %v1342, %v1358
        %v1360 = vsel %vm1350, %v1357, %v1359
        %v1361 = vsel %vm1349, %v1339, %v1342
        %v1362 = vsel %vm1352, %v1348, 1326507024
        %v1363 = vsel %vm1351, %v1345, %v1362
        %v1364 = vsel %vm1350, %v1361, %v1363
        %v1365 = vshll.u32 %v1325, 8
        %v1366 = vand.u32 %v1365, 65535
        %v1367 = vshrl.u32 %v1365, 16
        %v1368 = vand.u32 %v1364, 65535
        %v1369 = vshrl.u32 %v1364, 16
        %v1370 = vmul.u32 %v1366, %v1368
        %v1371 = vmul.u32 %v1366, %v1369
        %v1372 = vmul.u32 %v1367, %v1368
        %v1373 = vmul.u32 %v1367, %v1369
        %v1374 = vshll.u32 %v1371, 16
        %v1375 = vshrl.u32 %v1371, 16
        %v1376 = vshll.u32 %v1372, 16
        %v1377 = vshrl.u32 %v1372, 16
        %vm1378 = vc.u32 %v1370, %v1374
        %v1379 = vsel %vm1378, 1, 0
        %v1380 = vadd.s32 %v1370, %v1374
        %v1381 = vadd.s32 %v1373, %v1379
        %vm1382 = vc.u32 %v1380, %v1376
        %v1383 = vsel %vm1382, 1, 0
        %v1384 = vadd.s32 %v1380, %v1376
        %v1385 = vadd.s32 %v1381, %v1383
        %v1386 = vadd.s32 %v1385, %v1375
        %v1387 = vadd.s32 %v1386, %v1377
        %v1388 = vand.u32 %v1365, 65535
        %v1389 = vshrl.u32 %v1365, 16
        %v1390 = vand.u32 %v1360, 65535
        %v1391 = vshrl.u32 %v1360, 16
        %v1392 = vmul.u32 %v1388, %v1390
        %v1393 = vmul.u32 %v1388, %v1391
        %v1394 = vmul.u32 %v1389, %v1390
        %v1395 = vmul.u32 %v1389, %v1391
        %v1396 = vshll.u32 %v1393, 16
        %v1397 = vshrl.u32 %v1393, 16
        %v1398 = vshll.u32 %v1394, 16
        %v1399 = vshrl.u32 %v1394, 16
        %vm1400 = vc.u32 %v1392, %v1396
        %v1401 = vsel %vm1400, 1, 0
        %v1402 = vadd.s32 %v1392, %v1396
        %v1403 = vadd.s32 %v1395, %v1401
        %vm1404 = vc.u32 %v1402, %v1398
        %v1405 = vsel %vm1404, 1, 0
        %v1406 = vadd.s32 %v1402, %v1398
        %v1407 = vadd.s32 %v1403, %v1405
        %v1408 = vadd.s32 %v1407, %v1397
        %v1409 = vadd.s32 %v1408, %v1399
        %v1410 = vmul.u32 %v1365, %v1356
        %v1411 = vadd.s32 %v1387, %v1406
        %vm1412 = vc.u32 %v1387, %v1406
        %v1413 = vadd.s32 %v1409, 1
        %v1414 = vsel %vm1412, %v1413, %v1409
        %v1415 = vadd.s32 %v1410, %v1414
        %v1416 = vadd.s32 %v1415, 536870912
        %v1417 = vshrl.u32 %v1416, 30
        %v1418 = vshll.u32 %v1417, 30
        %v1419 = vsub.s32 %v1415, %v1418
        %vm1420 = vcmp.lt.s32.totalorder %v1419, 0
        %v1421 = vsub.s32 0, %v1419
        %v1422 = vsel %vm1420, %v1421, %v1419
        %v1423 = vclz %v1422
        %v1424 = vsub.s32 %v1423, 2
        %vm1425 = vcmp.gt.s32.totalorder 0, %v1424
        %v1426 = vsel %vm1425, 0, %v1424
        %v1427 = vsub.s32 32, %v1426
        %v1428 = vshll.u32 %v1419, %v1426
        %v1429 = vshrl.u32 %v1411, %v1427
        %v1430 = vor.u32 %v1428, %v1429
        %v1431 = vsub.s32 4294967266, %v1426
        %v1432 = vadd.s32 %v1431, 127
        %v1433 = vshll.u32 %v1432, 23
        %v1434 = vor.u32 4788187, %v1433
        %v1435 = vand.u32 2147483647, %v1434
        %v1437 = vcvt.s32.f32 %v1430
        %v1438 = vmul.f32 %v1437, %v1435
        %v1439 = vxor.u32 %v1438, 2147483648
        %v1440 = vsel %vm1319, %v1439, %v1438
        %v1441 = vsub.s32 4, %v1417
        %v1442 = vsel %vm1319, %v1441, %v1417
        %v1443 = vsel %vm1318, %v223, %v1440
        %v1444 = vsel %vm1318, 0, %v1442
        %v1445 = vmul.f32 %v1443, %v1443
        %v1446 = vmul.f32 %v1445, -0.001358992
        %v1447 = vadd.f32 %v1446, 0.041655596
        %v1448 = vmul.f32 %v1445, %v1447
        %v1449 = vadd.f32 %v1448, -0.4999988
        %v1450 = vmul.f32 %v1445, %v1449
        %v1451 = vadd.f32 1.0, %v1450
        %v1452 = vmul.f32 %v1443, %v1443
        %v1453 = vmul.f32 %v1452, -0.00019511016
        %v1454 = vadd.f32 %v1453, 0.008332121
        %v1455 = vmul.f32 %v1452, %v1454
        %v1456 = vadd.f32 %v1455, -0.16666654
        %v1457 = vmul.f32 %v1452, %v1456
        %v1458 = vadd.f32 %v1457, 1.0
        %v1459 = vmul.f32 %v1458, %v1443
        %vm1460 = vweird.f32 %v223
        %v1461 = vadd.s32 %v1444, 3
        %v1462 = vand.u32 %v1461, 3
        %vm1463 = vcmp.lt.s32.totalorder %v1462, 2
        %vm1464 = vcmp.eq.s32.totalorder %v1462, 0
        %v1465 = vxor.u32 %v1459, 2147483648
        %v1466 = vsel %vm1464, %v1451, %v1465
        %vm1467 = vcmp.eq.s32.totalorder %v1462, 2
        %v1468 = vxor.u32 %v1451, 2147483648
        %v1469 = vsel %vm1467, %v1468, %v1459
        %v1470 = vsel %vm1463, %v1466, %v1469
        %v1471 = vsel %vm1460, nan, %v1470
        %v1472 = vand.u32 2147483647, %v224
        %vm1473 = vcmp.le.f32.partialorder %v1472, 0.7853982
        %vm1474 = vcmp.lt.s32.totalorder %v224, 0
        %v1475 = vand.u32 %v224, 2139095040
        %v1476 = vshrl.u32 %v1475, 23
        %v1477 = vsub.s32 %v1476, 127
        %v1478 = vand.u32 2147483647, %v224
        %v1479 = vand.u32 %v1478, 8388607
        %v1480 = vor.u32 %v1479, 8388608
        %v1481 = vsub.s32 0, %v1480
        %v1482 = vadd.s32 %v1477, 1
        %vm1483 = vcmp.gt.s32.totalorder %v1482, 0
        %v1484 = vsel %vm1483, %v1482, 0
        %v1485 = vshrl.u32 %v1484, 5
        %v1486 = vand.u32 %v1484, 31
        %v1487 = vsub.s32 32, %v1486
        %v1488 = vshrl.u32 683565275, %v1487
        %v1489 = vshll.u32 683565275, %v1486
        %v1490 = vshrl.u32 2475754826, %v1487
        %v1491 = vor.u32 %v1489, %v1490
        %v1492 = vshll.u32 2475754826, %v1486
        %v1493 = vshrl.u32 2131351028, %v1487
        %v1494 = vor.u32 %v1492, %v1493
        %v1495 = vshll.u32 2131351028, %v1486
        %v1496 = vshrl.u32 2102212464, %v1487
        %v1497 = vor.u32 %v1495, %v1496
        %v1498 = vshll.u32 2102212464, %v1486
        %v1499 = vshrl.u32 920167782, %v1487
        %v1500 = vor.u32 %v1498, %v1499
        %v1501 = vshll.u32 920167782, %v1486
        %v1502 = vshrl.u32 1326507024, %v1487
        %v1503 = vor.u32 %v1501, %v1502
        %vm1504 = vcmp.lt.s32.totalorder %v1485, 1
        %vm1505 = vcmp.lt.s32.totalorder %v1485, 2
        %vm1506 = vcmp.lt.s32.totalorder %v1485, 3
        %vm1507 = vcmp.lt.s32.totalorder %v1485, 4
        %v1508 = vsel %vm1504, %v1488, %v1491
        %v1509 = vsel %vm1507, %v1497, 2102212464
        %v1510 = vsel %vm1506, %v1494, %v1509
        %v1511 = vsel %vm1505, %v1508, %v1510
        %v1512 = vsel %vm1504, %v1491, %v1494
        %v1513 = vsel %vm1507, %v1500, 920167782
        %v1514 = vsel %vm1506, %v1497, %v1513
        %v1515 = vsel %vm1505, %v1512, %v1514
        %v1516 = vsel %vm1504, %v1494, %v1497
        %v1517 = vsel %vm1507, %v1503, 1326507024
        %v1518 = vsel %vm1506, %v1500, %v1517
        %v1519 = vsel %vm1505, %v1516, %v1518
        %v1520 = vshll.u32 %v1480, 8
        %v1521 = vand.u32 %v1520, 65535
        %v1522 = vshrl.u32 %v1520, 16
        %v1523 = vand.u32 %v1519, 65535
        %v1524 = vshrl.u32 %v1519, 16
        %v1525 = vmul.u32 %v1521, %v1523
        %v1526 = vmul.u32 %v1521, %v1524
        %v1527 = vmul.u32 %v1522, %v1523
        %v1528 = vmul.u32 %v1522, %v1524
        %v1529 = vshll.u32 %v1526, 16
        %v1530 = vshrl.u32 %v1526, 16
        %v1531 = vshll.u32 %v1527, 16
        %v1532 = vshrl.u32 %v1527, 16
        %vm1533 = vc.u32 %v1525, %v1529
        %v1534 = vsel %vm1533, 1, 0
        %v1535 = vadd.s32 %v1525, %v1529
        %v1536 = vadd.s32 %v1528, %v1534
        %vm1537 = vc.u32 %v1535, %v1531
        %v1538 = vsel %vm1537, 1, 0
        %v1539 = vadd.s32 %v1535, %v1531
        %v1540 = vadd.s32 %v1536, %v1538
        %v1541 = vadd.s32 %v1540, %v1530
        %v1542 = vadd.s32 %v1541, %v1532
        %v1543 = vand.u32 %v1520, 65535
        %v1544 = vshrl.u32 %v1520, 16
        %v1545 = vand.u32 %v1515, 65535
        %v1546 = vshrl.u32 %v1515, 16
        %v1547 = vmul.u32 %v1543, %v1545
        %v1548 = vmul.u32 %v1543, %v1546
        %v1549 = vmul.u32 %v1544, %v1545
        %v1550 = vmul.u32 %v1544, %v1546
        %v1551 = vshll.u32 %v1548, 16
        %v1552 = vshrl.u32 %v1548, 16
        %v1553 = vshll.u32 %v1549, 16
        %v1554 = vshrl.u32 %v1549, 16
        %vm1555 = vc.u32 %v1547, %v1551
        %v1556 = vsel %vm1555, 1, 0
        %v1557 = vadd.s32 %v1547, %v1551
        %v1558 = vadd.s32 %v1550, %v1556
        %vm1559 = vc.u32 %v1557, %v1553
        %v1560 = vsel %vm1559, 1, 0
        %v1561 = vadd.s32 %v1557, %v1553
        %v1562 = vadd.s32 %v1558, %v1560
        %v1563 = vadd.s32 %v1562, %v1552
        %v1564 = vadd.s32 %v1563, %v1554
        %v1565 = vmul.u32 %v1520, %v1511
        %v1566 = vadd.s32 %v1542, %v1561
        %vm1567 = vc.u32 %v1542, %v1561
        %v1568 = vadd.s32 %v1564, 1
        %v1569 = vsel %vm1567, %v1568, %v1564
        %v1570 = vadd.s32 %v1565, %v1569
        %v1571 = vadd.s32 %v1570, 536870912
        %v1572 = vshrl.u32 %v1571, 30
        %v1573 = vshll.u32 %v1572, 30
        %v1574 = vsub.s32 %v1570, %v1573
        %vm1575 = vcmp.lt.s32.totalorder %v1574, 0
        %v1576 = vsub.s32 0, %v1574
        %v1577 = vsel %vm1575, %v1576, %v1574
        %v1578 = vclz %v1577
        %v1579 = vsub.s32 %v1578, 2
        %vm1580 = vcmp.gt.s32.totalorder 0, %v1579
        %v1581 = vsel %vm1580, 0, %v1579
        %v1582 = vsub.s32 32, %v1581
        %v1583 = vshll.u32 %v1574, %v1581
        %v1584 = vshrl.u32 %v1566, %v1582
        %v1585 = vor.u32 %v1583, %v1584
        %v1586 = vsub.s32 4294967266, %v1581
        %v1587 = vadd.s32 %v1586, 127
        %v1588 = vshll.u32 %v1587, 23
        %v1589 = vor.u32 4788187, %v1588
        %v1590 = vand.u32 2147483647, %v1589
        %v1592 = vcvt.s32.f32 %v1585
        %v1593 = vmul.f32 %v1592, %v1590
        %v1594 = vxor.u32 %v1593, 2147483648
        %v1595 = vsel %vm1474, %v1594, %v1593
        %v1596 = vsub.s32 4, %v1572
        %v1597 = vsel %vm1474, %v1596, %v1572
        %v1598 = vsel %vm1473, %v224, %v1595
        %v1599 = vsel %vm1473, 0, %v1597
        %v1600 = vmul.f32 %v1598, %v1598
        %v1601 = vmul.f32 %v1600, -0.001358992
        %v1602 = vadd.f32 %v1601, 0.041655596
        %v1603 = vmul.f32 %v1600, %v1602
        %v1604 = vadd.f32 %v1603, -0.4999988
        %v1605 = vmul.f32 %v1600, %v1604
        %v1606 = vadd.f32 1.0, %v1605
        %v1607 = vmul.f32 %v1598, %v1598
        %v1608 = vmul.f32 %v1607, -0.00019511016
        %v1609 = vadd.f32 %v1608, 0.008332121
        %v1610 = vmul.f32 %v1607, %v1609
        %v1611 = vadd.f32 %v1610, -0.16666654
        %v1612 = vmul.f32 %v1607, %v1611
        %v1613 = vadd.f32 %v1612, 1.0
        %v1614 = vmul.f32 %v1613, %v1598
        %vm1615 = vweird.f32 %v224
        %v1616 = vadd.s32 %v1599, 3
        %v1617 = vand.u32 %v1616, 3
        %vm1618 = vcmp.lt.s32.totalorder %v1617, 2
        %vm1619 = vcmp.eq.s32.totalorder %v1617, 0
        %v1620 = vxor.u32 %v1614, 2147483648
        %v1621 = vsel %vm1619, %v1606, %v1620
        %vm1622 = vcmp.eq.s32.totalorder %v1617, 2
        %v1623 = vxor.u32 %v1606, 2147483648
        %v1624 = vsel %vm1622, %v1623, %v1614
        %v1625 = vsel %vm1618, %v1621, %v1624
        %v1626 = vsel %vm1615, nan, %v1625
        %v1627 = vand.u32 2147483647, %v225
        %vm1628 = vcmp.le.f32.partialorder %v1627, 0.7853982
        %vm1629 = vcmp.lt.s32.totalorder %v225, 0
        %v1630 = vand.u32 %v225, 2139095040
        %v1631 = vshrl.u32 %v1630, 23
        %v1632 = vsub.s32 %v1631, 127
        %v1633 = vand.u32 2147483647, %v225
        %v1634 = vand.u32 %v1633, 8388607
        %v1635 = vor.u32 %v1634, 8388608
        %v1636 = vsub.s32 0, %v1635
        %v1637 = vadd.s32 %v1632, 1
        %vm1638 = vcmp.gt.s32.totalorder %v1637, 0
        %v1639 = vsel %vm1638, %v1637, 0
        %v1640 = vshrl.u32 %v1639, 5
        %v1641 = vand.u32 %v1639, 31
        %v1642 = vsub.s32 32, %v1641
        %v1643 = vshrl.u32 683565275, %v1642
        %v1644 = vshll.u32 683565275, %v1641
        %v1645 = vshrl.u32 2475754826, %v1642
        %v1646 = vor.u32 %v1644, %v1645
        %v1647 = vshll.u32 2475754826, %v1641
        %v1648 = vshrl.u32 2131351028, %v1642
        %v1649 = vor.u32 %v1647, %v1648
        %v1650 = vshll.u32 2131351028, %v1641
        %v1651 = vshrl.u32 2102212464, %v1642
        %v1652 = vor.u32 %v1650, %v1651
        %v1653 = vshll.u32 2102212464, %v1641
        %v1654 = vshrl.u32 920167782, %v1642
        %v1655 = vor.u32 %v1653, %v1654
        %v1656 = vshll.u32 920167782, %v1641
        %v1657 = vshrl.u32 1326507024, %v1642
        %v1658 = vor.u32 %v1656, %v1657
        %vm1659 = vcmp.lt.s32.totalorder %v1640, 1
        %vm1660 = vcmp.lt.s32.totalorder %v1640, 2
        %vm1661 = vcmp.lt.s32.totalorder %v1640, 3
        %vm1662 = vcmp.lt.s32.totalorder %v1640, 4
        %v1663 = vsel %vm1659, %v1643, %v1646
        %v1664 = vsel %vm1662, %v1652, 2102212464
        %v1665 = vsel %vm1661, %v1649, %v1664
        %v1666 = vsel %vm1660, %v1663, %v1665
        %v1667 = vsel %vm1659, %v1646, %v1649
        %v1668 = vsel %vm1662, %v1655, 920167782
        %v1669 = vsel %vm1661, %v1652, %v1668
        %v1670 = vsel %vm1660, %v1667, %v1669
        %v1671 = vsel %vm1659, %v1649, %v1652
        %v1672 = vsel %vm1662, %v1658, 1326507024
        %v1673 = vsel %vm1661, %v1655, %v1672
        %v1674 = vsel %vm1660, %v1671, %v1673
        %v1675 = vshll.u32 %v1635, 8
        %v1676 = vand.u32 %v1675, 65535
        %v1677 = vshrl.u32 %v1675, 16
        %v1678 = vand.u32 %v1674, 65535
        %v1679 = vshrl.u32 %v1674, 16
        %v1680 = vmul.u32 %v1676, %v1678
        %v1681 = vmul.u32 %v1676, %v1679
        %v1682 = vmul.u32 %v1677, %v1678
        %v1683 = vmul.u32 %v1677, %v1679
        %v1684 = vshll.u32 %v1681, 16
        %v1685 = vshrl.u32 %v1681, 16
        %v1686 = vshll.u32 %v1682, 16
        %v1687 = vshrl.u32 %v1682, 16
        %vm1688 = vc.u32 %v1680, %v1684
        %v1689 = vsel %vm1688, 1, 0
        %v1690 = vadd.s32 %v1680, %v1684
        %v1691 = vadd.s32 %v1683, %v1689
        %vm1692 = vc.u32 %v1690, %v1686
        %v1693 = vsel %vm1692, 1, 0
        %v1694 = vadd.s32 %v1690, %v1686
        %v1695 = vadd.s32 %v1691, %v1693
        %v1696 = vadd.s32 %v1695, %v1685
        %v1697 = vadd.s32 %v1696, %v1687
        %v1698 = vand.u32 %v1675, 65535
        %v1699 = vshrl.u32 %v1675, 16
        %v1700 = vand.u32 %v1670, 65535
        %v1701 = vshrl.u32 %v1670, 16
        %v1702 = vmul.u32 %v1698, %v1700
        %v1703 = vmul.u32 %v1698, %v1701
        %v1704 = vmul.u32 %v1699, %v1700
        %v1705 = vmul.u32 %v1699, %v1701
        %v1706 = vshll.u32 %v1703, 16
        %v1707 = vshrl.u32 %v1703, 16
        %v1708 = vshll.u32 %v1704, 16
        %v1709 = vshrl.u32 %v1704, 16
        %vm1710 = vc.u32 %v1702, %v1706
        %v1711 = vsel %vm1710, 1, 0
        %v1712 = vadd.s32 %v1702, %v1706
        %v1713 = vadd.s32 %v1705, %v1711
        %vm1714 = vc.u32 %v1712, %v1708
        %v1715 = vsel %vm1714, 1, 0
        %v1716 = vadd.s32 %v1712, %v1708
        %v1717 = vadd.s32 %v1713, %v1715
        %v1718 = vadd.s32 %v1717, %v1707
        %v1719 = vadd.s32 %v1718, %v1709
        %v1720 = vmul.u32 %v1675, %v1666
        %v1721 = vadd.s32 %v1697, %v1716
        %vm1722 = vc.u32 %v1697, %v1716
        %v1723 = vadd.s32 %v1719, 1
        %v1724 = vsel %vm1722, %v1723, %v1719
        %v1725 = vadd.s32 %v1720, %v1724
        %v1726 = vadd.s32 %v1725, 536870912
        %v1727 = vshrl.u32 %v1726, 30
        %v1728 = vshll.u32 %v1727, 30
        %v1729 = vsub.s32 %v1725, %v1728
        %vm1730 = vcmp.lt.s32.totalorder %v1729, 0
        %v1731 = vsub.s32 0, %v1729
        %v1732 = vsel %vm1730, %v1731, %v1729
        %v1733 = vclz %v1732
        %v1734 = vsub.s32 %v1733, 2
        %vm1735 = vcmp.gt.s32.totalorder 0, %v1734
        %v1736 = vsel %vm1735, 0, %v1734
        %v1737 = vsub.s32 32, %v1736
        %v1738 = vshll.u32 %v1729, %v1736
        %v1739 = vshrl.u32 %v1721, %v1737
        %v1740 = vor.u32 %v1738, %v1739
        %v1741 = vsub.s32 4294967266, %v1736
        %v1742 = vadd.s32 %v1741, 127
        %v1743 = vshll.u32 %v1742, 23
        %v1744 = vor.u32 4788187, %v1743
        %v1745 = vand.u32 2147483647, %v1744
        %v1747 = vcvt.s32.f32 %v1740
        %v1748 = vmul.f32 %v1747, %v1745
        %v1749 = vxor.u32 %v1748, 2147483648
        %v1750 = vsel %vm1629, %v1749, %v1748
        %v1751 = vsub.s32 4, %v1727
        %v1752 = vsel %vm1629, %v1751, %v1727
        %v1753 = vsel %vm1628, %v225, %v1750
        %v1754 = vsel %vm1628, 0, %v1752
        %v1755 = vmul.f32 %v1753, %v1753
        %v1756 = vmul.f32 %v1755, -0.001358992
        %v1757 = vadd.f32 %v1756, 0.041655596
        %v1758 = vmul.f32 %v1755, %v1757
        %v1759 = vadd.f32 %v1758, -0.4999988
        %v1760 = vmul.f32 %v1755, %v1759
        %v1761 = vadd.f32 1.0, %v1760
        %v1762 = vmul.f32 %v1753, %v1753
        %v1763 = vmul.f32 %v1762, -0.00019511016
        %v1764 = vadd.f32 %v1763, 0.008332121
        %v1765 = vmul.f32 %v1762, %v1764
        %v1766 = vadd.f32 %v1765, -0.16666654
        %v1767 = vmul.f32 %v1762, %v1766
        %v1768 = vadd.f32 %v1767, 1.0
        %v1769 = vmul.f32 %v1768, %v1753
        %vm1770 = vweird.f32 %v225
        %v1771 = vadd.s32 %v1754, 3
        %v1772 = vand.u32 %v1771, 3
        %vm1773 = vcmp.lt.s32.totalorder %v1772, 2
        %vm1774 = vcmp.eq.s32.totalorder %v1772, 0
        %v1775 = vxor.u32 %v1769, 2147483648
        %v1776 = vsel %vm1774, %v1761, %v1775
        %vm1777 = vcmp.eq.s32.totalorder %v1772, 2
        %v1778 = vxor.u32 %v1761, 2147483648
        %v1779 = vsel %vm1777, %v1778, %v1769
        %v1780 = vsel %vm1773, %v1776, %v1779
        %v1781 = vsel %vm1770, nan, %v1780
        %v1782 = vand.u32 2147483647, %v226
        %vm1783 = vcmp.le.f32.partialorder %v1782, 0.7853982
        %vm1784 = vcmp.lt.s32.totalorder %v226, 0
        %v1785 = vand.u32 %v226, 2139095040
        %v1786 = vshrl.u32 %v1785, 23
        %v1787 = vsub.s32 %v1786, 127
        %v1788 = vand.u32 2147483647, %v226
        %v1789 = vand.u32 %v1788, 8388607
        %v1790 = vor.u32 %v1789, 8388608
        %v1791 = vsub.s32 0, %v1790
        %v1792 = vadd.s32 %v1787, 1
        %vm1793 = vcmp.gt.s32.totalorder %v1792, 0
        %v1794 = vsel %vm1793, %v1792, 0
        %v1795 = vshrl.u32 %v1794, 5
        %v1796 = vand.u32 %v1794, 31
        %v1797 = vsub.s32 32, %v1796
        %v1798 = vshrl.u32 683565275, %v1797
        %v1799 = vshll.u32 683565275, %v1796
        %v1800 = vshrl.u32 2475754826, %v1797
        %v1801 = vor.u32 %v1799, %v1800
        %v1802 = vshll.u32 2475754826, %v1796
        %v1803 = vshrl.u32 2131351028, %v1797
        %v1804 = vor.u32 %v1802, %v1803
        %v1805 = vshll.u32 2131351028, %v1796
        %v1806 = vshrl.u32 2102212464, %v1797
        %v1807 = vor.u32 %v1805, %v1806
        %v1808 = vshll.u32 2102212464, %v1796
        %v1809 = vshrl.u32 920167782, %v1797
        %v1810 = vor.u32 %v1808, %v1809
        %v1811 = vshll.u32 920167782, %v1796
        %v1812 = vshrl.u32 1326507024, %v1797
        %v1813 = vor.u32 %v1811, %v1812
        %vm1814 = vcmp.lt.s32.totalorder %v1795, 1
        %vm1815 = vcmp.lt.s32.totalorder %v1795, 2
        %vm1816 = vcmp.lt.s32.totalorder %v1795, 3
        %vm1817 = vcmp.lt.s32.totalorder %v1795, 4
        %v1818 = vsel %vm1814, %v1798, %v1801
        %v1819 = vsel %vm1817, %v1807, 2102212464
        %v1820 = vsel %vm1816, %v1804, %v1819
        %v1821 = vsel %vm1815, %v1818, %v1820
        %v1822 = vsel %vm1814, %v1801, %v1804
        %v1823 = vsel %vm1817, %v1810, 920167782
        %v1824 = vsel %vm1816, %v1807, %v1823
        %v1825 = vsel %vm1815, %v1822, %v1824
        %v1826 = vsel %vm1814, %v1804, %v1807
        %v1827 = vsel %vm1817, %v1813, 1326507024
        %v1828 = vsel %vm1816, %v1810, %v1827
        %v1829 = vsel %vm1815, %v1826, %v1828
        %v1830 = vshll.u32 %v1790, 8
        %v1831 = vand.u32 %v1830, 65535
        %v1832 = vshrl.u32 %v1830, 16
        %v1833 = vand.u32 %v1829, 65535
        %v1834 = vshrl.u32 %v1829, 16
        %v1835 = vmul.u32 %v1831, %v1833
        %v1836 = vmul.u32 %v1831, %v1834
        %v1837 = vmul.u32 %v1832, %v1833
        %v1838 = vmul.u32 %v1832, %v1834
        %v1839 = vshll.u32 %v1836, 16
        %v1840 = vshrl.u32 %v1836, 16
        %v1841 = vshll.u32 %v1837, 16
        %v1842 = vshrl.u32 %v1837, 16
        %vm1843 = vc.u32 %v1835, %v1839
        %v1844 = vsel %vm1843, 1, 0
        %v1845 = vadd.s32 %v1835, %v1839
        %v1846 = vadd.s32 %v1838, %v1844
        %vm1847 = vc.u32 %v1845, %v1841
        %v1848 = vsel %vm1847, 1, 0
        %v1849 = vadd.s32 %v1845, %v1841
        %v1850 = vadd.s32 %v1846, %v1848
        %v1851 = vadd.s32 %v1850, %v1840
        %v1852 = vadd.s32 %v1851, %v1842
        %v1853 = vand.u32 %v1830, 65535
        %v1854 = vshrl.u32 %v1830, 16
        %v1855 = vand.u32 %v1825, 65535
        %v1856 = vshrl.u32 %v1825, 16
        %v1857 = vmul.u32 %v1853, %v1855
        %v1858 = vmul.u32 %v1853, %v1856
        %v1859 = vmul.u32 %v1854, %v1855
        %v1860 = vmul.u32 %v1854, %v1856
        %v1861 = vshll.u32 %v1858, 16
        %v1862 = vshrl.u32 %v1858, 16
        %v1863 = vshll.u32 %v1859, 16
        %v1864 = vshrl.u32 %v1859, 16
        %vm1865 = vc.u32 %v1857, %v1861
        %v1866 = vsel %vm1865, 1, 0
        %v1867 = vadd.s32 %v1857, %v1861
        %v1868 = vadd.s32 %v1860, %v1866
        %vm1869 = vc.u32 %v1867, %v1863
        %v1870 = vsel %vm1869, 1, 0
        %v1871 = vadd.s32 %v1867, %v1863
        %v1872 = vadd.s32 %v1868, %v1870
        %v1873 = vadd.s32 %v1872, %v1862
        %v1874 = vadd.s32 %v1873, %v1864
        %v1875 = vmul.u32 %v1830, %v1821
        %v1876 = vadd.s32 %v1852, %v1871
        %vm1877 = vc.u32 %v1852, %v1871
        %v1878 = vadd.s32 %v1874, 1
        %v1879 = vsel %vm1877, %v1878, %v1874
        %v1880 = vadd.s32 %v1875, %v1879
        %v1881 = vadd.s32 %v1880, 536870912
        %v1882 = vshrl.u32 %v1881, 30
        %v1883 = vshll.u32 %v1882, 30
        %v1884 = vsub.s32 %v1880, %v1883
        %vm1885 = vcmp.lt.s32.totalorder %v1884, 0
        %v1886 = vsub.s32 0, %v1884
        %v1887 = vsel %vm1885, %v1886, %v1884
        %v1888 = vclz %v1887
        %v1889 = vsub.s32 %v1888, 2
        %vm1890 = vcmp.gt.s32.totalorder 0, %v1889
        %v1891 = vsel %vm1890, 0, %v1889
        %v1892 = vsub.s32 32, %v1891
        %v1893 = vshll.u32 %v1884, %v1891
        %v1894 = vshrl.u32 %v1876, %v1892
        %v1895 = vor.u32 %v1893, %v1894
        %v1896 = vsub.s32 4294967266, %v1891
        %v1897 = vadd.s32 %v1896, 127
        %v1898 = vshll.u32 %v1897, 23
        %v1899 = vor.u32 4788187, %v1898
        %v1900 = vand.u32 2147483647, %v1899
        %v1902 = vcvt.s32.f32 %v1895
        %v1903 = vmul.f32 %v1902, %v1900
        %v1904 = vxor.u32 %v1903, 2147483648
        %v1905 = vsel %vm1784, %v1904, %v1903
        %v1906 = vsub.s32 4, %v1882
        %v1907 = vsel %vm1784, %v1906, %v1882
        %v1908 = vsel %vm1783, %v226, %v1905
        %v1909 = vsel %vm1783, 0, %v1907
        %v1910 = vmul.f32 %v1908, %v1908
        %v1911 = vmul.f32 %v1910, -0.001358992
        %v1912 = vadd.f32 %v1911, 0.041655596
        %v1913 = vmul.f32 %v1910, %v1912
        %v1914 = vadd.f32 %v1913, -0.4999988
        %v1915 = vmul.f32 %v1910, %v1914
        %v1916 = vadd.f32 1.0, %v1915
        %v1917 = vmul.f32 %v1908, %v1908
        %v1918 = vmul.f32 %v1917, -0.00019511016
        %v1919 = vadd.f32 %v1918, 0.008332121
        %v1920 = vmul.f32 %v1917, %v1919
        %v1921 = vadd.f32 %v1920, -0.16666654
        %v1922 = vmul.f32 %v1917, %v1921
        %v1923 = vadd.f32 %v1922, 1.0
        %v1924 = vmul.f32 %v1923, %v1908
        %vm1925 = vweird.f32 %v226
        %v1926 = vadd.s32 %v1909, 3
        %v1927 = vand.u32 %v1926, 3
        %vm1928 = vcmp.lt.s32.totalorder %v1927, 2
        %vm1929 = vcmp.eq.s32.totalorder %v1927, 0
        %v1930 = vxor.u32 %v1924, 2147483648
        %v1931 = vsel %vm1929, %v1916, %v1930
        %vm1932 = vcmp.eq.s32.totalorder %v1927, 2
        %v1933 = vxor.u32 %v1916, 2147483648
        %v1934 = vsel %vm1932, %v1933, %v1924
        %v1935 = vsel %vm1928, %v1931, %v1934
        %v1936 = vsel %vm1925, nan, %v1935
        %v1937 = vand.u32 2147483647, %v227
        %vm1938 = vcmp.le.f32.partialorder %v1937, 0.7853982
        %vm1939 = vcmp.lt.s32.totalorder %v227, 0
        %v1940 = vand.u32 %v227, 2139095040
        %v1941 = vshrl.u32 %v1940, 23
        %v1942 = vsub.s32 %v1941, 127
        %v1943 = vand.u32 2147483647, %v227
        %v1944 = vand.u32 %v1943, 8388607
        %v1945 = vor.u32 %v1944, 8388608
        %v1946 = vsub.s32 0, %v1945
        %v1947 = vadd.s32 %v1942, 1
        %vm1948 = vcmp.gt.s32.totalorder %v1947, 0
        %v1949 = vsel %vm1948, %v1947, 0
        %v1950 = vshrl.u32 %v1949, 5
        %v1951 = vand.u32 %v1949, 31
        %v1952 = vsub.s32 32, %v1951
        %v1953 = vshrl.u32 683565275, %v1952
        %v1954 = vshll.u32 683565275, %v1951
        %v1955 = vshrl.u32 2475754826, %v1952
        %v1956 = vor.u32 %v1954, %v1955
        %v1957 = vshll.u32 2475754826, %v1951
        %v1958 = vshrl.u32 2131351028, %v1952
        %v1959 = vor.u32 %v1957, %v1958
        %v1960 = vshll.u32 2131351028, %v1951
        %v1961 = vshrl.u32 2102212464, %v1952
        %v1962 = vor.u32 %v1960, %v1961
        %v1963 = vshll.u32 2102212464, %v1951
        %v1964 = vshrl.u32 920167782, %v1952
        %v1965 = vor.u32 %v1963, %v1964
        %v1966 = vshll.u32 920167782, %v1951
        %v1967 = vshrl.u32 1326507024, %v1952
        %v1968 = vor.u32 %v1966, %v1967
        %vm1969 = vcmp.lt.s32.totalorder %v1950, 1
        %vm1970 = vcmp.lt.s32.totalorder %v1950, 2
        %vm1971 = vcmp.lt.s32.totalorder %v1950, 3
        %vm1972 = vcmp.lt.s32.totalorder %v1950, 4
        %v1973 = vsel %vm1969, %v1953, %v1956
        %v1974 = vsel %vm1972, %v1962, 2102212464
        %v1975 = vsel %vm1971, %v1959, %v1974
        %v1976 = vsel %vm1970, %v1973, %v1975
        %v1977 = vsel %vm1969, %v1956, %v1959
        %v1978 = vsel %vm1972, %v1965, 920167782
        %v1979 = vsel %vm1971, %v1962, %v1978
        %v1980 = vsel %vm1970, %v1977, %v1979
        %v1981 = vsel %vm1969, %v1959, %v1962
        %v1982 = vsel %vm1972, %v1968, 1326507024
        %v1983 = vsel %vm1971, %v1965, %v1982
        %v1984 = vsel %vm1970, %v1981, %v1983
        %v1985 = vshll.u32 %v1945, 8
        %v1986 = vand.u32 %v1985, 65535
        %v1987 = vshrl.u32 %v1985, 16
        %v1988 = vand.u32 %v1984, 65535
        %v1989 = vshrl.u32 %v1984, 16
        %v1990 = vmul.u32 %v1986, %v1988
        %v1991 = vmul.u32 %v1986, %v1989
        %v1992 = vmul.u32 %v1987, %v1988
        %v1993 = vmul.u32 %v1987, %v1989
        %v1994 = vshll.u32 %v1991, 16
        %v1995 = vshrl.u32 %v1991, 16
        %v1996 = vshll.u32 %v1992, 16
        %v1997 = vshrl.u32 %v1992, 16
        %vm1998 = vc.u32 %v1990, %v1994
        %v1999 = vsel %vm1998, 1, 0
        %v2000 = vadd.s32 %v1990, %v1994
        %v2001 = vadd.s32 %v1993, %v1999
        %vm2002 = vc.u32 %v2000, %v1996
        %v2003 = vsel %vm2002, 1, 0
        %v2004 = vadd.s32 %v2000, %v1996
        %v2005 = vadd.s32 %v2001, %v2003
        %v2006 = vadd.s32 %v2005, %v1995
        %v2007 = vadd.s32 %v2006, %v1997
        %v2008 = vand.u32 %v1985, 65535
        %v2009 = vshrl.u32 %v1985, 16
        %v2010 = vand.u32 %v1980, 65535
        %v2011 = vshrl.u32 %v1980, 16
        %v2012 = vmul.u32 %v2008, %v2010
        %v2013 = vmul.u32 %v2008, %v2011
        %v2014 = vmul.u32 %v2009, %v2010
        %v2015 = vmul.u32 %v2009, %v2011
        %v2016 = vshll.u32 %v2013, 16
        %v2017 = vshrl.u32 %v2013, 16
        %v2018 = vshll.u32 %v2014, 16
        %v2019 = vshrl.u32 %v2014, 16
        %vm2020 = vc.u32 %v2012, %v2016
        %v2021 = vsel %vm2020, 1, 0
        %v2022 = vadd.s32 %v2012, %v2016
        %v2023 = vadd.s32 %v2015, %v2021
        %vm2024 = vc.u32 %v2022, %v2018
        %v2025 = vsel %vm2024, 1, 0
        %v2026 = vadd.s32 %v2022, %v2018
        %v2027 = vadd.s32 %v2023, %v2025
        %v2028 = vadd.s32 %v2027, %v2017
        %v2029 = vadd.s32 %v2028, %v2019
        %v2030 = vmul.u32 %v1985, %v1976
        %v2031 = vadd.s32 %v2007, %v2026
        %vm2032 = vc.u32 %v2007, %v2026
        %v2033 = vadd.s32 %v2029, 1
        %v2034 = vsel %vm2032, %v2033, %v2029
        %v2035 = vadd.s32 %v2030, %v2034
        %v2036 = vadd.s32 %v2035, 536870912
        %v2037 = vshrl.u32 %v2036, 30
        %v2038 = vshll.u32 %v2037, 30
        %v2039 = vsub.s32 %v2035, %v2038
        %vm2040 = vcmp.lt.s32.totalorder %v2039, 0
        %v2041 = vsub.s32 0, %v2039
        %v2042 = vsel %vm2040, %v2041, %v2039
        %v2043 = vclz %v2042
        %v2044 = vsub.s32 %v2043, 2
        %vm2045 = vcmp.gt.s32.totalorder 0, %v2044
        %v2046 = vsel %vm2045, 0, %v2044
        %v2047 = vsub.s32 32, %v2046
        %v2048 = vshll.u32 %v2039, %v2046
        %v2049 = vshrl.u32 %v2031, %v2047
        %v2050 = vor.u32 %v2048, %v2049
        %v2051 = vsub.s32 4294967266, %v2046
        %v2052 = vadd.s32 %v2051, 127
        %v2053 = vshll.u32 %v2052, 23
        %v2054 = vor.u32 4788187, %v2053
        %v2055 = vand.u32 2147483647, %v2054
        %v2057 = vcvt.s32.f32 %v2050
        %v2058 = vmul.f32 %v2057, %v2055
        %v2059 = vxor.u32 %v2058, 2147483648
        %v2060 = vsel %vm1939, %v2059, %v2058
        %v2061 = vsub.s32 4, %v2037
        %v2062 = vsel %vm1939, %v2061, %v2037
        %v2063 = vsel %vm1938, %v227, %v2060
        %v2064 = vsel %vm1938, 0, %v2062
        %v2065 = vmul.f32 %v2063, %v2063
        %v2066 = vmul.f32 %v2065, -0.001358992
        %v2067 = vadd.f32 %v2066, 0.041655596
        %v2068 = vmul.f32 %v2065, %v2067
        %v2069 = vadd.f32 %v2068, -0.4999988
        %v2070 = vmul.f32 %v2065, %v2069
        %v2071 = vadd.f32 1.0, %v2070
        %v2072 = vmul.f32 %v2063, %v2063
        %v2073 = vmul.f32 %v2072, -0.00019511016
        %v2074 = vadd.f32 %v2073, 0.008332121
        %v2075 = vmul.f32 %v2072, %v2074
        %v2076 = vadd.f32 %v2075, -0.16666654
        %v2077 = vmul.f32 %v2072, %v2076
        %v2078 = vadd.f32 %v2077, 1.0
        %v2079 = vmul.f32 %v2078, %v2063
        %vm2080 = vweird.f32 %v227
        %v2081 = vadd.s32 %v2064, 3
        %v2082 = vand.u32 %v2081, 3
        %vm2083 = vcmp.lt.s32.totalorder %v2082, 2
        %vm2084 = vcmp.eq.s32.totalorder %v2082, 0
        %v2085 = vxor.u32 %v2079, 2147483648
        %v2086 = vsel %vm2084, %v2071, %v2085
        %vm2087 = vcmp.eq.s32.totalorder %v2082, 2
        %v2088 = vxor.u32 %v2071, 2147483648
        %v2089 = vsel %vm2087, %v2088, %v2079
        %v2090 = vsel %vm2083, %v2086, %v2089
        %v2091 = vsel %vm2080, nan, %v2090
        %v2092 = vand.u32 2147483647, %v228
        %vm2093 = vcmp.le.f32.partialorder %v2092, 0.7853982
        %vm2094 = vcmp.lt.s32.totalorder %v228, 0
        %v2095 = vand.u32 %v228, 2139095040
        %v2096 = vshrl.u32 %v2095, 23
        %v2097 = vsub.s32 %v2096, 127
        %v2098 = vand.u32 2147483647, %v228
        %v2099 = vand.u32 %v2098, 8388607
        %v2100 = vor.u32 %v2099, 8388608
        %v2101 = vsub.s32 0, %v2100
        %v2102 = vadd.s32 %v2097, 1
        %vm2103 = vcmp.gt.s32.totalorder %v2102, 0
        %v2104 = vsel %vm2103, %v2102, 0
        %v2105 = vshrl.u32 %v2104, 5
        %v2106 = vand.u32 %v2104, 31
        %v2107 = vsub.s32 32, %v2106
        %v2108 = vshrl.u32 683565275, %v2107
        %v2109 = vshll.u32 683565275, %v2106
        %v2110 = vshrl.u32 2475754826, %v2107
        %v2111 = vor.u32 %v2109, %v2110
        %v2112 = vshll.u32 2475754826, %v2106
        %v2113 = vshrl.u32 2131351028, %v2107
        %v2114 = vor.u32 %v2112, %v2113
        %v2115 = vshll.u32 2131351028, %v2106
        %v2116 = vshrl.u32 2102212464, %v2107
        %v2117 = vor.u32 %v2115, %v2116
        %v2118 = vshll.u32 2102212464, %v2106
        %v2119 = vshrl.u32 920167782, %v2107
        %v2120 = vor.u32 %v2118, %v2119
        %v2121 = vshll.u32 920167782, %v2106
        %v2122 = vshrl.u32 1326507024, %v2107
        %v2123 = vor.u32 %v2121, %v2122
        %vm2124 = vcmp.lt.s32.totalorder %v2105, 1
        %vm2125 = vcmp.lt.s32.totalorder %v2105, 2
        %vm2126 = vcmp.lt.s32.totalorder %v2105, 3
        %vm2127 = vcmp.lt.s32.totalorder %v2105, 4
        %v2128 = vsel %vm2124, %v2108, %v2111
        %v2129 = vsel %vm2127, %v2117, 2102212464
        %v2130 = vsel %vm2126, %v2114, %v2129
        %v2131 = vsel %vm2125, %v2128, %v2130
        %v2132 = vsel %vm2124, %v2111, %v2114
        %v2133 = vsel %vm2127, %v2120, 920167782
        %v2134 = vsel %vm2126, %v2117, %v2133
        %v2135 = vsel %vm2125, %v2132, %v2134
        %v2136 = vsel %vm2124, %v2114, %v2117
        %v2137 = vsel %vm2127, %v2123, 1326507024
        %v2138 = vsel %vm2126, %v2120, %v2137
        %v2139 = vsel %vm2125, %v2136, %v2138
        %v2140 = vshll.u32 %v2100, 8
        %v2141 = vand.u32 %v2140, 65535
        %v2142 = vshrl.u32 %v2140, 16
        %v2143 = vand.u32 %v2139, 65535
        %v2144 = vshrl.u32 %v2139, 16
        %v2145 = vmul.u32 %v2141, %v2143
        %v2146 = vmul.u32 %v2141, %v2144
        %v2147 = vmul.u32 %v2142, %v2143
        %v2148 = vmul.u32 %v2142, %v2144
        %v2149 = vshll.u32 %v2146, 16
        %v2150 = vshrl.u32 %v2146, 16
        %v2151 = vshll.u32 %v2147, 16
        %v2152 = vshrl.u32 %v2147, 16
        %vm2153 = vc.u32 %v2145, %v2149
        %v2154 = vsel %vm2153, 1, 0
        %v2155 = vadd.s32 %v2145, %v2149
        %v2156 = vadd.s32 %v2148, %v2154
        %vm2157 = vc.u32 %v2155, %v2151
        %v2158 = vsel %vm2157, 1, 0
        %v2159 = vadd.s32 %v2155, %v2151
        %v2160 = vadd.s32 %v2156, %v2158
        %v2161 = vadd.s32 %v2160, %v2150
        %v2162 = vadd.s32 %v2161, %v2152
        %v2163 = vand.u32 %v2140, 65535
        %v2164 = vshrl.u32 %v2140, 16
        %v2165 = vand.u32 %v2135, 65535
        %v2166 = vshrl.u32 %v2135, 16
        %v2167 = vmul.u32 %v2163, %v2165
        %v2168 = vmul.u32 %v2163, %v2166
        %v2169 = vmul.u32 %v2164, %v2165
        %v2170 = vmul.u32 %v2164, %v2166
        %v2171 = vshll.u32 %v2168, 16
        %v2172 = vshrl.u32 %v2168, 16
        %v2173 = vshll.u32 %v2169, 16
        %v2174 = vshrl.u32 %v2169, 16
        %vm2175 = vc.u32 %v2167, %v2171
        %v2176 = vsel %vm2175, 1, 0
        %v2177 = vadd.s32 %v2167, %v2171
        %v2178 = vadd.s32 %v2170, %v2176
        %vm2179 = vc.u32 %v2177, %v2173
        %v2180 = vsel %vm2179, 1, 0
        %v2181 = vadd.s32 %v2177, %v2173
        %v2182 = vadd.s32 %v2178, %v2180
        %v2183 = vadd.s32 %v2182, %v2172
        %v2184 = vadd.s32 %v2183, %v2174
        %v2185 = vmul.u32 %v2140, %v2131
        %v2186 = vadd.s32 %v2162, %v2181
        %vm2187 = vc.u32 %v2162, %v2181
        %v2188 = vadd.s32 %v2184, 1
        %v2189 = vsel %vm2187, %v2188, %v2184
        %v2190 = vadd.s32 %v2185, %v2189
        %v2191 = vadd.s32 %v2190, 536870912
        %v2192 = vshrl.u32 %v2191, 30
        %v2193 = vshll.u32 %v2192, 30
        %v2194 = vsub.s32 %v2190, %v2193
        %vm2195 = vcmp.lt.s32.totalorder %v2194, 0
        %v2196 = vsub.s32 0, %v2194
        %v2197 = vsel %vm2195, %v2196, %v2194
        %v2198 = vclz %v2197
        %v2199 = vsub.s32 %v2198, 2
        %vm2200 = vcmp.gt.s32.totalorder 0, %v2199
        %v2201 = vsel %vm2200, 0, %v2199
        %v2202 = vsub.s32 32, %v2201
        %v2203 = vshll.u32 %v2194, %v2201
        %v2204 = vshrl.u32 %v2186, %v2202
        %v2205 = vor.u32 %v2203, %v2204
        %v2206 = vsub.s32 4294967266, %v2201
        %v2207 = vadd.s32 %v2206, 127
        %v2208 = vshll.u32 %v2207, 23
        %v2209 = vor.u32 4788187, %v2208
        %v2210 = vand.u32 2147483647, %v2209
        %v2212 = vcvt.s32.f32 %v2205
        %v2213 = vmul.f32 %v2212, %v2210
        %v2214 = vxor.u32 %v2213, 2147483648
        %v2215 = vsel %vm2094, %v2214, %v2213
        %v2216 = vsub.s32 4, %v2192
        %v2217 = vsel %vm2094, %v2216, %v2192
        %v2218 = vsel %vm2093, %v228, %v2215
        %v2219 = vsel %vm2093, 0, %v2217
        %v2220 = vmul.f32 %v2218, %v2218
        %v2221 = vmul.f32 %v2220, -0.001358992
        %v2222 = vadd.f32 %v2221, 0.041655596
        %v2223 = vmul.f32 %v2220, %v2222
        %v2224 = vadd.f32 %v2223, -0.4999988
        %v2225 = vmul.f32 %v2220, %v2224
        %v2226 = vadd.f32 1.0, %v2225
        %v2227 = vmul.f32 %v2218, %v2218
        %v2228 = vmul.f32 %v2227, -0.00019511016
        %v2229 = vadd.f32 %v2228, 0.008332121
        %v2230 = vmul.f32 %v2227, %v2229
        %v2231 = vadd.f32 %v2230, -0.16666654
        %v2232 = vmul.f32 %v2227, %v2231
        %v2233 = vadd.f32 %v2232, 1.0
        %v2234 = vmul.f32 %v2233, %v2218
        %vm2235 = vweird.f32 %v228
        %v2236 = vadd.s32 %v2219, 3
        %v2237 = vand.u32 %v2236, 3
        %vm2238 = vcmp.lt.s32.totalorder %v2237, 2
        %vm2239 = vcmp.eq.s32.totalorder %v2237, 0
        %v2240 = vxor.u32 %v2234, 2147483648
        %v2241 = vsel %vm2239, %v2226, %v2240
        %vm2242 = vcmp.eq.s32.totalorder %v2237, 2
        %v2243 = vxor.u32 %v2226, 2147483648
        %v2244 = vsel %vm2242, %v2243, %v2234
        %v2245 = vsel %vm2238, %v2241, %v2244
        %v2246 = vsel %vm2235, nan, %v2245
        %v2247 = vand.u32 2147483647, %v229
        %vm2248 = vcmp.le.f32.partialorder %v2247, 0.7853982
        %vm2249 = vcmp.lt.s32.totalorder %v229, 0
        %v2250 = vand.u32 %v229, 2139095040
        %v2251 = vshrl.u32 %v2250, 23
        %v2252 = vsub.s32 %v2251, 127
        %v2253 = vand.u32 2147483647, %v229
        %v2254 = vand.u32 %v2253, 8388607
        %v2255 = vor.u32 %v2254, 8388608
        %v2256 = vsub.s32 0, %v2255
        %v2257 = vadd.s32 %v2252, 1
        %vm2258 = vcmp.gt.s32.totalorder %v2257, 0
        %v2259 = vsel %vm2258, %v2257, 0
        %v2260 = vshrl.u32 %v2259, 5
        %v2261 = vand.u32 %v2259, 31
        %v2262 = vsub.s32 32, %v2261
        %v2263 = vshrl.u32 683565275, %v2262
        %v2264 = vshll.u32 683565275, %v2261
        %v2265 = vshrl.u32 2475754826, %v2262
        %v2266 = vor.u32 %v2264, %v2265
        %v2267 = vshll.u32 2475754826, %v2261
        %v2268 = vshrl.u32 2131351028, %v2262
        %v2269 = vor.u32 %v2267, %v2268
        %v2270 = vshll.u32 2131351028, %v2261
        %v2271 = vshrl.u32 2102212464, %v2262
        %v2272 = vor.u32 %v2270, %v2271
        %v2273 = vshll.u32 2102212464, %v2261
        %v2274 = vshrl.u32 920167782, %v2262
        %v2275 = vor.u32 %v2273, %v2274
        %v2276 = vshll.u32 920167782, %v2261
        %v2277 = vshrl.u32 1326507024, %v2262
        %v2278 = vor.u32 %v2276, %v2277
        %vm2279 = vcmp.lt.s32.totalorder %v2260, 1
        %vm2280 = vcmp.lt.s32.totalorder %v2260, 2
        %vm2281 = vcmp.lt.s32.totalorder %v2260, 3
        %vm2282 = vcmp.lt.s32.totalorder %v2260, 4
        %v2283 = vsel %vm2279, %v2263, %v2266
        %v2284 = vsel %vm2282, %v2272, 2102212464
        %v2285 = vsel %vm2281, %v2269, %v2284
        %v2286 = vsel %vm2280, %v2283, %v2285
        %v2287 = vsel %vm2279, %v2266, %v2269
        %v2288 = vsel %vm2282, %v2275, 920167782
        %v2289 = vsel %vm2281, %v2272, %v2288
        %v2290 = vsel %vm2280, %v2287, %v2289
        %v2291 = vsel %vm2279, %v2269, %v2272
        %v2292 = vsel %vm2282, %v2278, 1326507024
        %v2293 = vsel %vm2281, %v2275, %v2292
        %v2294 = vsel %vm2280, %v2291, %v2293
        %v2295 = vshll.u32 %v2255, 8
        %v2296 = vand.u32 %v2295, 65535
        %v2297 = vshrl.u32 %v2295, 16
        %v2298 = vand.u32 %v2294, 65535
        %v2299 = vshrl.u32 %v2294, 16
        %v2300 = vmul.u32 %v2296, %v2298
        %v2301 = vmul.u32 %v2296, %v2299
        %v2302 = vmul.u32 %v2297, %v2298
        %v2303 = vmul.u32 %v2297, %v2299
        %v2304 = vshll.u32 %v2301, 16
        %v2305 = vshrl.u32 %v2301, 16
        %v2306 = vshll.u32 %v2302, 16
        %v2307 = vshrl.u32 %v2302, 16
        %vm2308 = vc.u32 %v2300, %v2304
        %v2309 = vsel %vm2308, 1, 0
        %v2310 = vadd.s32 %v2300, %v2304
        %v2311 = vadd.s32 %v2303, %v2309
        %vm2312 = vc.u32 %v2310, %v2306
        %v2313 = vsel %vm2312, 1, 0
        %v2314 = vadd.s32 %v2310, %v2306
        %v2315 = vadd.s32 %v2311, %v2313
        %v2316 = vadd.s32 %v2315, %v2305
        %v2317 = vadd.s32 %v2316, %v2307
        %v2318 = vand.u32 %v2295, 65535
        %v2319 = vshrl.u32 %v2295, 16
        %v2320 = vand.u32 %v2290, 65535
        %v2321 = vshrl.u32 %v2290, 16
        %v2322 = vmul.u32 %v2318, %v2320
        %v2323 = vmul.u32 %v2318, %v2321
        %v2324 = vmul.u32 %v2319, %v2320
        %v2325 = vmul.u32 %v2319, %v2321
        %v2326 = vshll.u32 %v2323, 16
        %v2327 = vshrl.u32 %v2323, 16
        %v2328 = vshll.u32 %v2324, 16
        %v2329 = vshrl.u32 %v2324, 16
        %vm2330 = vc.u32 %v2322, %v2326
        %v2331 = vsel %vm2330, 1, 0
        %v2332 = vadd.s32 %v2322, %v2326
        %v2333 = vadd.s32 %v2325, %v2331
        %vm2334 = vc.u32 %v2332, %v2328
        %v2335 = vsel %vm2334, 1, 0
        %v2336 = vadd.s32 %v2332, %v2328
        %v2337 = vadd.s32 %v2333, %v2335
        %v2338 = vadd.s32 %v2337, %v2327
        %v2339 = vadd.s32 %v2338, %v2329
        %v2340 = vmul.u32 %v2295, %v2286
        %v2341 = vadd.s32 %v2317, %v2336
        %vm2342 = vc.u32 %v2317, %v2336
        %v2343 = vadd.s32 %v2339, 1
        %v2344 = vsel %vm2342, %v2343, %v2339
        %v2345 = vadd.s32 %v2340, %v2344
        %v2346 = vadd.s32 %v2345, 536870912
        %v2347 = vshrl.u32 %v2346, 30
        %v2348 = vshll.u32 %v2347, 30
        %v2349 = vsub.s32 %v2345, %v2348
        %vm2350 = vcmp.lt.s32.totalorder %v2349, 0
        %v2351 = vsub.s32 0, %v2349
        %v2352 = vsel %vm2350, %v2351, %v2349
        %v2353 = vclz %v2352
        %v2354 = vsub.s32 %v2353, 2
        %vm2355 = vcmp.gt.s32.totalorder 0, %v2354
        %v2356 = vsel %vm2355, 0, %v2354
        %v2357 = vsub.s32 32, %v2356
        %v2358 = vshll.u32 %v2349, %v2356
        %v2359 = vshrl.u32 %v2341, %v2357
        %v2360 = vor.u32 %v2358, %v2359
        %v2361 = vsub.s32 4294967266, %v2356
        %v2362 = vadd.s32 %v2361, 127
        %v2363 = vshll.u32 %v2362, 23
        %v2364 = vor.u32 4788187, %v2363
        %v2365 = vand.u32 2147483647, %v2364
        %v2367 = vcvt.s32.f32 %v2360
        %v2368 = vmul.f32 %v2367, %v2365
        %v2369 = vxor.u32 %v2368, 2147483648
        %v2370 = vsel %vm2249, %v2369, %v2368
        %v2371 = vsub.s32 4, %v2347
        %v2372 = vsel %vm2249, %v2371, %v2347
        %v2373 = vsel %vm2248, %v229, %v2370
        %v2374 = vsel %vm2248, 0, %v2372
        %v2375 = vmul.f32 %v2373, %v2373
        %v2376 = vmul.f32 %v2375, -0.001358992
        %v2377 = vadd.f32 %v2376, 0.041655596
        %v2378 = vmul.f32 %v2375, %v2377
        %v2379 = vadd.f32 %v2378, -0.4999988
        %v2380 = vmul.f32 %v2375, %v2379
        %v2381 = vadd.f32 1.0, %v2380
        %v2382 = vmul.f32 %v2373, %v2373
        %v2383 = vmul.f32 %v2382, -0.00019511016
        %v2384 = vadd.f32 %v2383, 0.008332121
        %v2385 = vmul.f32 %v2382, %v2384
        %v2386 = vadd.f32 %v2385, -0.16666654
        %v2387 = vmul.f32 %v2382, %v2386
        %v2388 = vadd.f32 %v2387, 1.0
        %v2389 = vmul.f32 %v2388, %v2373
        %vm2390 = vweird.f32 %v229
        %v2391 = vadd.s32 %v2374, 3
        %v2392 = vand.u32 %v2391, 3
        %vm2393 = vcmp.lt.s32.totalorder %v2392, 2
        %vm2394 = vcmp.eq.s32.totalorder %v2392, 0
        %v2395 = vxor.u32 %v2389, 2147483648
        %v2396 = vsel %vm2394, %v2381, %v2395
        %vm2397 = vcmp.eq.s32.totalorder %v2392, 2
        %v2398 = vxor.u32 %v2381, 2147483648
        %v2399 = vsel %vm2397, %v2398, %v2389
        %v2400 = vsel %vm2393, %v2396, %v2399
        %v2401 = vsel %vm2390, nan, %v2400
        %v2402 = vand.u32 2147483647, %v230
        %vm2403 = vcmp.le.f32.partialorder %v2402, 0.7853982
        %vm2404 = vcmp.lt.s32.totalorder %v230, 0
        %v2405 = vand.u32 %v230, 2139095040
        %v2406 = vshrl.u32 %v2405, 23
        %v2407 = vsub.s32 %v2406, 127
        %v2408 = vand.u32 2147483647, %v230
        %v2409 = vand.u32 %v2408, 8388607
        %v2410 = vor.u32 %v2409, 8388608
        %v2411 = vsub.s32 0, %v2410
        %v2412 = vadd.s32 %v2407, 1
        %vm2413 = vcmp.gt.s32.totalorder %v2412, 0
        %v2414 = vsel %vm2413, %v2412, 0
        %v2415 = vshrl.u32 %v2414, 5
        %v2416 = vand.u32 %v2414, 31
        %v2417 = vsub.s32 32, %v2416
        %v2418 = vshrl.u32 683565275, %v2417
        %v2419 = vshll.u32 683565275, %v2416
        %v2420 = vshrl.u32 2475754826, %v2417
        %v2421 = vor.u32 %v2419, %v2420
        %v2422 = vshll.u32 2475754826, %v2416
        %v2423 = vshrl.u32 2131351028, %v2417
        %v2424 = vor.u32 %v2422, %v2423
        %v2425 = vshll.u32 2131351028, %v2416
        %v2426 = vshrl.u32 2102212464, %v2417
        %v2427 = vor.u32 %v2425, %v2426
        %v2428 = vshll.u32 2102212464, %v2416
        %v2429 = vshrl.u32 920167782, %v2417
        %v2430 = vor.u32 %v2428, %v2429
        %v2431 = vshll.u32 920167782, %v2416
        %v2432 = vshrl.u32 1326507024, %v2417
        %v2433 = vor.u32 %v2431, %v2432
        %vm2434 = vcmp.lt.s32.totalorder %v2415, 1
        %vm2435 = vcmp.lt.s32.totalorder %v2415, 2
        %vm2436 = vcmp.lt.s32.totalorder %v2415, 3
        %vm2437 = vcmp.lt.s32.totalorder %v2415, 4
        %v2438 = vsel %vm2434, %v2418, %v2421
        %v2439 = vsel %vm2437, %v2427, 2102212464
        %v2440 = vsel %vm2436, %v2424, %v2439
        %v2441 = vsel %vm2435, %v2438, %v2440
        %v2442 = vsel %vm2434, %v2421, %v2424
        %v2443 = vsel %vm2437, %v2430, 920167782
        %v2444 = vsel %vm2436, %v2427, %v2443
        %v2445 = vsel %vm2435, %v2442, %v2444
        %v2446 = vsel %vm2434, %v2424, %v2427
        %v2447 = vsel %vm2437, %v2433, 1326507024
        %v2448 = vsel %vm2436, %v2430, %v2447
        %v2449 = vsel %vm2435, %v2446, %v2448
        %v2450 = vshll.u32 %v2410, 8
        %v2451 = vand.u32 %v2450, 65535
        %v2452 = vshrl.u32 %v2450, 16
        %v2453 = vand.u32 %v2449, 65535
        %v2454 = vshrl.u32 %v2449, 16
        %v2455 = vmul.u32 %v2451, %v2453
        %v2456 = vmul.u32 %v2451, %v2454
        %v2457 = vmul.u32 %v2452, %v2453
        %v2458 = vmul.u32 %v2452, %v2454
        %v2459 = vshll.u32 %v2456, 16
        %v2460 = vshrl.u32 %v2456, 16
        %v2461 = vshll.u32 %v2457, 16
        %v2462 = vshrl.u32 %v2457, 16
        %vm2463 = vc.u32 %v2455, %v2459
        %v2464 = vsel %vm2463, 1, 0
        %v2465 = vadd.s32 %v2455, %v2459
        %v2466 = vadd.s32 %v2458, %v2464
        %vm2467 = vc.u32 %v2465, %v2461
        %v2468 = vsel %vm2467, 1, 0
        %v2469 = vadd.s32 %v2465, %v2461
        %v2470 = vadd.s32 %v2466, %v2468
        %v2471 = vadd.s32 %v2470, %v2460
        %v2472 = vadd.s32 %v2471, %v2462
        %v2473 = vand.u32 %v2450, 65535
        %v2474 = vshrl.u32 %v2450, 16
        %v2475 = vand.u32 %v2445, 65535
        %v2476 = vshrl.u32 %v2445, 16
        %v2477 = vmul.u32 %v2473, %v2475
        %v2478 = vmul.u32 %v2473, %v2476
        %v2479 = vmul.u32 %v2474, %v2475
        %v2480 = vmul.u32 %v2474, %v2476
        %v2481 = vshll.u32 %v2478, 16
        %v2482 = vshrl.u32 %v2478, 16
        %v2483 = vshll.u32 %v2479, 16
        %v2484 = vshrl.u32 %v2479, 16
        %vm2485 = vc.u32 %v2477, %v2481
        %v2486 = vsel %vm2485, 1, 0
        %v2487 = vadd.s32 %v2477, %v2481
        %v2488 = vadd.s32 %v2480, %v2486
        %vm2489 = vc.u32 %v2487, %v2483
        %v2490 = vsel %vm2489, 1, 0
        %v2491 = vadd.s32 %v2487, %v2483
        %v2492 = vadd.s32 %v2488, %v2490
        %v2493 = vadd.s32 %v2492, %v2482
        %v2494 = vadd.s32 %v2493, %v2484
        %v2495 = vmul.u32 %v2450, %v2441
        %v2496 = vadd.s32 %v2472, %v2491
        %vm2497 = vc.u32 %v2472, %v2491
        %v2498 = vadd.s32 %v2494, 1
        %v2499 = vsel %vm2497, %v2498, %v2494
        %v2500 = vadd.s32 %v2495, %v2499
        %v2501 = vadd.s32 %v2500, 536870912
        %v2502 = vshrl.u32 %v2501, 30
        %v2503 = vshll.u32 %v2502, 30
        %v2504 = vsub.s32 %v2500, %v2503
        %vm2505 = vcmp.lt.s32.totalorder %v2504, 0
        %v2506 = vsub.s32 0, %v2504
        %v2507 = vsel %vm2505, %v2506, %v2504
        %v2508 = vclz %v2507
        %v2509 = vsub.s32 %v2508, 2
        %vm2510 = vcmp.gt.s32.totalorder 0, %v2509
        %v2511 = vsel %vm2510, 0, %v2509
        %v2512 = vsub.s32 32, %v2511
        %v2513 = vshll.u32 %v2504, %v2511
        %v2514 = vshrl.u32 %v2496, %v2512
        %v2515 = vor.u32 %v2513, %v2514
        %v2516 = vsub.s32 4294967266, %v2511
        %v2517 = vadd.s32 %v2516, 127
        %v2518 = vshll.u32 %v2517, 23
        %v2519 = vor.u32 4788187, %v2518
        %v2520 = vand.u32 2147483647, %v2519
        %v2522 = vcvt.s32.f32 %v2515
        %v2523 = vmul.f32 %v2522, %v2520
        %v2524 = vxor.u32 %v2523, 2147483648
        %v2525 = vsel %vm2404, %v2524, %v2523
        %v2526 = vsub.s32 4, %v2502
        %v2527 = vsel %vm2404, %v2526, %v2502
        %v2528 = vsel %vm2403, %v230, %v2525
        %v2529 = vsel %vm2403, 0, %v2527
        %v2530 = vmul.f32 %v2528, %v2528
        %v2531 = vmul.f32 %v2530, -0.001358992
        %v2532 = vadd.f32 %v2531, 0.041655596
        %v2533 = vmul.f32 %v2530, %v2532
        %v2534 = vadd.f32 %v2533, -0.4999988
        %v2535 = vmul.f32 %v2530, %v2534
        %v2536 = vadd.f32 1.0, %v2535
        %v2537 = vmul.f32 %v2528, %v2528
        %v2538 = vmul.f32 %v2537, -0.00019511016
        %v2539 = vadd.f32 %v2538, 0.008332121
        %v2540 = vmul.f32 %v2537, %v2539
        %v2541 = vadd.f32 %v2540, -0.16666654
        %v2542 = vmul.f32 %v2537, %v2541
        %v2543 = vadd.f32 %v2542, 1.0
        %v2544 = vmul.f32 %v2543, %v2528
        %vm2545 = vweird.f32 %v230
        %v2546 = vadd.s32 %v2529, 3
        %v2547 = vand.u32 %v2546, 3
        %vm2548 = vcmp.lt.s32.totalorder %v2547, 2
        %vm2549 = vcmp.eq.s32.totalorder %v2547, 0
        %v2550 = vxor.u32 %v2544, 2147483648
        %v2551 = vsel %vm2549, %v2536, %v2550
        %vm2552 = vcmp.eq.s32.totalorder %v2547, 2
        %v2553 = vxor.u32 %v2536, 2147483648
        %v2554 = vsel %vm2552, %v2553, %v2544
        %v2555 = vsel %vm2548, %v2551, %v2554
        %v2556 = vsel %vm2545, nan, %v2555
        %v2557 = vand.u32 2147483647, %v231
        %vm2558 = vcmp.le.f32.partialorder %v2557, 0.7853982
        %vm2559 = vcmp.lt.s32.totalorder %v231, 0
        %v2560 = vand.u32 %v231, 2139095040
        %v2561 = vshrl.u32 %v2560, 23
        %v2562 = vsub.s32 %v2561, 127
        %v2563 = vand.u32 2147483647, %v231
        %v2564 = vand.u32 %v2563, 8388607
        %v2565 = vor.u32 %v2564, 8388608
        %v2566 = vsub.s32 0, %v2565
        %v2567 = vadd.s32 %v2562, 1
        %vm2568 = vcmp.gt.s32.totalorder %v2567, 0
        %v2569 = vsel %vm2568, %v2567, 0
        %v2570 = vshrl.u32 %v2569, 5
        %v2571 = vand.u32 %v2569, 31
        %v2572 = vsub.s32 32, %v2571
        %v2573 = vshrl.u32 683565275, %v2572
        %v2574 = vshll.u32 683565275, %v2571
        %v2575 = vshrl.u32 2475754826, %v2572
        %v2576 = vor.u32 %v2574, %v2575
        %v2577 = vshll.u32 2475754826, %v2571
        %v2578 = vshrl.u32 2131351028, %v2572
        %v2579 = vor.u32 %v2577, %v2578
        %v2580 = vshll.u32 2131351028, %v2571
        %v2581 = vshrl.u32 2102212464, %v2572
        %v2582 = vor.u32 %v2580, %v2581
        %v2583 = vshll.u32 2102212464, %v2571
        %v2584 = vshrl.u32 920167782, %v2572
        %v2585 = vor.u32 %v2583, %v2584
        %v2586 = vshll.u32 920167782, %v2571
        %v2587 = vshrl.u32 1326507024, %v2572
        %v2588 = vor.u32 %v2586, %v2587
        %vm2589 = vcmp.lt.s32.totalorder %v2570, 1
        %vm2590 = vcmp.lt.s32.totalorder %v2570, 2
        %vm2591 = vcmp.lt.s32.totalorder %v2570, 3
        %vm2592 = vcmp.lt.s32.totalorder %v2570, 4
        %v2593 = vsel %vm2589, %v2573, %v2576
        %v2594 = vsel %vm2592, %v2582, 2102212464
        %v2595 = vsel %vm2591, %v2579, %v2594
        %v2596 = vsel %vm2590, %v2593, %v2595
        %v2597 = vsel %vm2589, %v2576, %v2579
        %v2598 = vsel %vm2592, %v2585, 920167782
        %v2599 = vsel %vm2591, %v2582, %v2598
        %v2600 = vsel %vm2590, %v2597, %v2599
        %v2601 = vsel %vm2589, %v2579, %v2582
        %v2602 = vsel %vm2592, %v2588, 1326507024
        %v2603 = vsel %vm2591, %v2585, %v2602
        %v2604 = vsel %vm2590, %v2601, %v2603
        %v2605 = vshll.u32 %v2565, 8
        %v2606 = vand.u32 %v2605, 65535
        %v2607 = vshrl.u32 %v2605, 16
        %v2608 = vand.u32 %v2604, 65535
        %v2609 = vshrl.u32 %v2604, 16
        %v2610 = vmul.u32 %v2606, %v2608
        %v2611 = vmul.u32 %v2606, %v2609
        %v2612 = vmul.u32 %v2607, %v2608
        %v2613 = vmul.u32 %v2607, %v2609
        %v2614 = vshll.u32 %v2611, 16
        %v2615 = vshrl.u32 %v2611, 16
        %v2616 = vshll.u32 %v2612, 16
        %v2617 = vshrl.u32 %v2612, 16
        %vm2618 = vc.u32 %v2610, %v2614
        %v2619 = vsel %vm2618, 1, 0
        %v2620 = vadd.s32 %v2610, %v2614
        %v2621 = vadd.s32 %v2613, %v2619
        %vm2622 = vc.u32 %v2620, %v2616
        %v2623 = vsel %vm2622, 1, 0
        %v2624 = vadd.s32 %v2620, %v2616
        %v2625 = vadd.s32 %v2621, %v2623
        %v2626 = vadd.s32 %v2625, %v2615
        %v2627 = vadd.s32 %v2626, %v2617
        %v2628 = vand.u32 %v2605, 65535
        %v2629 = vshrl.u32 %v2605, 16
        %v2630 = vand.u32 %v2600, 65535
        %v2631 = vshrl.u32 %v2600, 16
        %v2632 = vmul.u32 %v2628, %v2630
        %v2633 = vmul.u32 %v2628, %v2631
        %v2634 = vmul.u32 %v2629, %v2630
        %v2635 = vmul.u32 %v2629, %v2631
        %v2636 = vshll.u32 %v2633, 16
        %v2637 = vshrl.u32 %v2633, 16
        %v2638 = vshll.u32 %v2634, 16
        %v2639 = vshrl.u32 %v2634, 16
        %vm2640 = vc.u32 %v2632, %v2636
        %v2641 = vsel %vm2640, 1, 0
        %v2642 = vadd.s32 %v2632, %v2636
        %v2643 = vadd.s32 %v2635, %v2641
        %vm2644 = vc.u32 %v2642, %v2638
        %v2645 = vsel %vm2644, 1, 0
        %v2646 = vadd.s32 %v2642, %v2638
        %v2647 = vadd.s32 %v2643, %v2645
        %v2648 = vadd.s32 %v2647, %v2637
        %v2649 = vadd.s32 %v2648, %v2639
        %v2650 = vmul.u32 %v2605, %v2596
        %v2651 = vadd.s32 %v2627, %v2646
        %vm2652 = vc.u32 %v2627, %v2646
        %v2653 = vadd.s32 %v2649, 1
        %v2654 = vsel %vm2652, %v2653, %v2649
        %v2655 = vadd.s32 %v2650, %v2654
        %v2656 = vadd.s32 %v2655, 536870912
        %v2657 = vshrl.u32 %v2656, 30
        %v2658 = vshll.u32 %v2657, 30
        %v2659 = vsub.s32 %v2655, %v2658
        %vm2660 = vcmp.lt.s32.totalorder %v2659, 0
        %v2661 = vsub.s32 0, %v2659
        %v2662 = vsel %vm2660, %v2661, %v2659
        %v2663 = vclz %v2662
        %v2664 = vsub.s32 %v2663, 2
        %vm2665 = vcmp.gt.s32.totalorder 0, %v2664
        %v2666 = vsel %vm2665, 0, %v2664
        %v2667 = vsub.s32 32, %v2666
        %v2668 = vshll.u32 %v2659, %v2666
        %v2669 = vshrl.u32 %v2651, %v2667
        %v2670 = vor.u32 %v2668, %v2669
        %v2671 = vsub.s32 4294967266, %v2666
        %v2672 = vadd.s32 %v2671, 127
        %v2673 = vshll.u32 %v2672, 23
        %v2674 = vor.u32 4788187, %v2673
        %v2675 = vand.u32 2147483647, %v2674
        %v2677 = vcvt.s32.f32 %v2670
        %v2678 = vmul.f32 %v2677, %v2675
        %v2679 = vxor.u32 %v2678, 2147483648
        %v2680 = vsel %vm2559, %v2679, %v2678
        %v2681 = vsub.s32 4, %v2657
        %v2682 = vsel %vm2559, %v2681, %v2657
        %v2683 = vsel %vm2558, %v231, %v2680
        %v2684 = vsel %vm2558, 0, %v2682
        %v2685 = vmul.f32 %v2683, %v2683
        %v2686 = vmul.f32 %v2685, -0.001358992
        %v2687 = vadd.f32 %v2686, 0.041655596
        %v2688 = vmul.f32 %v2685, %v2687
        %v2689 = vadd.f32 %v2688, -0.4999988
        %v2690 = vmul.f32 %v2685, %v2689
        %v2691 = vadd.f32 1.0, %v2690
        %v2692 = vmul.f32 %v2683, %v2683
        %v2693 = vmul.f32 %v2692, -0.00019511016
        %v2694 = vadd.f32 %v2693, 0.008332121
        %v2695 = vmul.f32 %v2692, %v2694
        %v2696 = vadd.f32 %v2695, -0.16666654
        %v2697 = vmul.f32 %v2692, %v2696
        %v2698 = vadd.f32 %v2697, 1.0
        %v2699 = vmul.f32 %v2698, %v2683
        %vm2700 = vweird.f32 %v231
        %v2701 = vadd.s32 %v2684, 3
        %v2702 = vand.u32 %v2701, 3
        %vm2703 = vcmp.lt.s32.totalorder %v2702, 2
        %vm2704 = vcmp.eq.s32.totalorder %v2702, 0
        %v2705 = vxor.u32 %v2699, 2147483648
        %v2706 = vsel %vm2704, %v2691, %v2705
        %vm2707 = vcmp.eq.s32.totalorder %v2702, 2
        %v2708 = vxor.u32 %v2691, 2147483648
        %v2709 = vsel %vm2707, %v2708, %v2699
        %v2710 = vsel %vm2703, %v2706, %v2709
        %v2711 = vsel %vm2700, nan, %v2710
        %2712 = vst [vmem:[%s179] sm:$0xff] %v386
        %2713 = vst [vmem:[%s179 + $0x8] sm:$0xff] %v541
        %2714 = vst [vmem:[%s179 + $0x10] sm:$0xff] %v696
        %2715 = vst [vmem:[%s179 + $0x18] sm:$0xff] %v851
        %2716 = vst [vmem:[%s179 + $0x20] sm:$0xff] %v1006
        %2717 = vst [vmem:[%s179 + $0x28] sm:$0xff] %v1161
        %2718 = vst [vmem:[%s179 + $0x30] sm:$0xff] %v1316
        %2719 = vst [vmem:[%s179 + $0x38] sm:$0xff] %v1471
        %2720 = vst [vmem:[%s179 + $0x40] sm:$0xff] %v1626
        %2721 = vst [vmem:[%s179 + $0x48] sm:$0xff] %v1781
        %2722 = vst [vmem:[%s179 + $0x50] sm:$0xff] %v1936
        %2723 = vst [vmem:[%s179 + $0x58] sm:$0xff] %v2091
        %2724 = vst [vmem:[%s179 + $0x60] sm:$0xff] %v2246
        %2725 = vst [vmem:[%s179 + $0x68] sm:$0xff] %v2401
        %2726 = vst [vmem:[%s179 + $0x70] sm:$0xff] %v2556
        %2727 = vst [vmem:[%s179 + $0x78] sm:$0xff] %v2711
        %s2728 = sand.u32 %s75, 1
        %s2729 = scalar_lea.sflag [#allocation4], %s2728
        %s2730 = sand.u32 %s75, 1
        %s2731 = smul.addr %s2730, 128
        %s2732 = scalar_lea.vmem [#allocation7], %s2731
        // Predicated region
        $region37: #{tpu_custom_call.1} parent=27 // pred_check
          %p2733 = pneg %p85
        $region38: #{tpu_custom_call.1} parent=27 // pred_check_branch
          %2735 = sbr.rel (%p2733) target = $region40
        $region39: #{tpu_custom_call.1} parent=27 // pred_region
          %s2736 = smul.u32 8, %s20
          %2738 = vsyncadd %s2729, 0
          %s2739 = smul.addr %s2736, 2
          %s2740 = smul.addr %s2739, 8
          %s2741 = scalar_lea.hbm %s2, %s2740
          %s2742 = sshll.u32 %s2732, 4
          %s2743 = int_to_ptr.vmem [resolvable:$true] %s2742
          %s2744 = sshll.u32 %s2741, 4
          %s2745 = int_to_ptr.hbm [resolvable:$true] %s2744
          %2750 = dma.vmem_to_hbm [thread:$0]  %s2743, 2048, %s2745, %s2729, 128, 128, 8
        $region40: #{tpu_custom_call.1} parent=27 // pred_fallthru
          _
      $region28: #{tpu_custom_call.1} parent=5 // pred_fallthru
        _
      %p2751 = scmp.le.s32.totalorder 2, %s15
      // Predicated region
      $region41: #{tpu_custom_call.1} parent=5 // pred_check
        %p2752 = pneg %p2751
      $region42: #{tpu_custom_call.1} parent=5 // pred_check_branch
        %2754 = sbr.rel (%p2752) target = $region44
      $region43: #{tpu_custom_call.1} parent=5 // pred_region
        %s2755 = ssub.s32 %s15, 2
        // Predicated region
        $region45: #{tpu_custom_call.1} parent=43 // pred_check
          %p2756 = pneg %p91
        $region46: #{tpu_custom_call.1} parent=43 // pred_check_branch
          %2758 = sbr.rel (%p2756) target = $region48
        $region47: #{tpu_custom_call.1} parent=43 // pred_region
          %s2759 = sand.u32 %s76, 1
          %s2760 = scalar_lea.sflag [#allocation4], %s2759
          %s2761 = sand.u32 %s76, 1
          %s2762 = smul.addr %s2761, 128
          %s2763 = scalar_lea.vmem [#allocation7], %s2762
          %2765 = dma.done %s2760, 2048
        $region48: #{tpu_custom_call.1} parent=43 // pred_fallthru
          _
      $region44: #{tpu_custom_call.1} parent=5 // pred_fallthru
        _
    $region6: #{tpu_custom_call.1} parent=1 // loop_footer
      %s19 = sadd.s32 1, %s15
    $region7: #{tpu_custom_call.1} parent=1 // loop_footer_branch
      %14 = sbr.rel target = $region3
    $region8: #{tpu_custom_call.1} parent=1 // loop_exit
      _
    %2766 = vsyncpa [#allocation3], 1
    %s2767 = scalar_lea.sflag [#allocation3], 1
    %2768 = vsyncpa %s2767, 1
    %2769 = vsyncpa [#allocation6], 1
    %2770 = vsyncpa [#allocation4], 1
    %s2771 = scalar_lea.sflag [#allocation4], 1
    %2772 = vsyncpa %s2771, 1

</llo_original>
